<compile_context>
chip_gen: v7x
topology: tpu7x:2x2x1
jax: 0.10.0
libtpu: 0.0.40
codegen_flags: <defaults>
</compile_context>

<pallas_src>
import jax
import jax.numpy as jnp
from jax.experimental import pallas as pl
from jax.experimental.pallas import tpu as pltpu


def _cross_mix_kernel(upre_ref, upost_ref, icha_ref, vmat_ref, b2_ref, out_ref):
    # upre_ref/upost_ref: (1, T, C) tiles; icha_ref: (1, 2, C); vmat_ref: (1, C, 2)
    pre = upre_ref[0].astype(jnp.float32)        # (T, C)
    post = upost_ref[0].astype(jnp.float32)      # (T, C)

    icha_pre = icha_ref[0, 0:1, :]               # (1, C)  gates upost
    icha_post = icha_ref[0, 1:2, :]              # (1, C)  gates upre

    uchapre = post * icha_pre + pre              # (T, C)
    uchapost = pre * icha_post + post            # (T, C)

    # proj2 (1x1 conv 2C -> 1) with icha folded into vmat: two (T,C)@(C,1) MXU dots.
    logit = (jnp.dot(pre, vmat_ref[0, :, 0:1],
                     preferred_element_type=jnp.float32,
                     precision=jax.lax.Precision.HIGHEST)
             + jnp.dot(post, vmat_ref[0, :, 1:2],
                       preferred_element_type=jnp.float32,
                       precision=jax.lax.Precision.HIGHEST)
             + b2_ref[0])                        # (T, 1)
    ispa = jax.nn.sigmoid(logit)

    uspapre = uchapost * ispa + pre
    uspapost = uchapre * ispa + post

    # Fused channel concat -> single full-width, lane-dense store of (T, 2C).
    dt = out_ref.dtype
    out_ref[0] = jnp.concatenate([uspapre.astype(dt), uspapost.astype(dt)], axis=-1)


def _pick_hw_tile(hw: int, c: int, itemsize: int) -> int:
    """Largest spatial tile that divides HW, is sublane-aligned (multiple of 8)
    and keeps the double-buffered working set comfortably inside VMEM."""
    per_row = 8 * c * itemsize + 40 * c          # pipelined I/O + f32 temporaries (rough)
    budget = 24 * 1024 * 1024
    max_rows = max(8, min(1024, budget // max(per_row, 1)))
    if hw <= max_rows:
        return hw                                # whole plane (full-dim block: always legal)
    start = (max_rows // 8) * 8
    for t in range(start, 7, -8):
        if hw % t == 0:
            return t
    return hw                                    # no aligned divisor found; fall back


def cross_mix(upre, upost, w1, b1, w2, b2):
    """Pallas Cross_mix forward.

    upre, upost : (B, H, W, C) channels-last activations (f32 or bf16).
    w1 : (2C, 2C) = proj1.weight[:, :, 0, 0].T   (1x1 conv 2C->2C as matmul)
    b1 : (2C,)    = proj1.bias
    w2 : (2C,)    = proj2.weight[0, :, 0, 0]     (1x1 conv 2C->1)
    b2 : (1,)     = proj2.bias
    returns (B, H, W, 2C) = concat([uspapre, uspapost], channel-last).
    """
    B, H, W, C = upre.shape
    HW = H * W
    dtype = upre.dtype
    itemsize = jnp.dtype(dtype).itemsize

    upre_f = upre.reshape(B, HW, C)
    upost_f = upost.reshape(B, HW, C)

    # ---- tiny per-batch precompute in plain JAX (f32): pool -> proj1 -> gate ----
    f32 = jnp.float32
    mean_pre = jnp.mean(upre_f.astype(f32), axis=1)                  # (B, C)
    mean_post = jnp.mean(upost_f.astype(f32), axis=1)                # (B, C)
    pooled = jnp.concatenate([mean_pre, mean_post], axis=1)          # (B, 2C)
    icha = jax.nn.sigmoid(pooled @ w1.astype(f32) + b1.astype(f32))  # (B, 2C)
    icha_pre, icha_post = icha[:, :C], icha[:, C:]

    w2f = w2.astype(f32)
    # proj2 weights with icha folded in (see kernel comment).
    v_pre = w2f[None, :C] + icha_post * w2f[None, C:]                # (B, C)
    v_post = icha_pre * w2f[None, :C] + w2f[None, C:]                # (B, C)

    icha_in = jnp.stack([icha_pre, icha_post], axis=1)               # (B, 2, C) f32
    vmat_in = jnp.stack([v_pre, v_post], axis=-1)                    # (B, C, 2) f32
    b2_in = b2.astype(f32).reshape(1)

    # ---- spatial tiling (grid = (batch, hw-tiles), both parallel) ----
    T = _pick_hw_tile(HW, C, itemsize)
    n_t = HW // T

    vmem_est = 16 * T * C * itemsize + 48 * T * C                    # generous headroom
    vmem_limit = int(min(max(vmem_est, 4 << 20), 48 << 20))

    out = pl.pallas_call(
        _cross_mix_kernel,
        out_shape=jax.ShapeDtypeStruct((B, HW, 2 * C), dtype),
        grid_spec=pltpu.PrefetchScalarGridSpec(
            num_scalar_prefetch=0,
            grid=(B, n_t),
            in_specs=[
                pl.BlockSpec((1, T, C), lambda b, t: (b, t, 0)),     # upre tile
                pl.BlockSpec((1, T, C), lambda b, t: (b, t, 0)),     # upost tile
                pl.BlockSpec((1, 2, C), lambda b, t: (b, 0, 0)),     # icha (per-batch, resident)
                pl.BlockSpec((1, C, 2), lambda b, t: (b, 0, 0)),     # folded proj2 weights
                pl.BlockSpec(memory_space=pltpu.SMEM),               # b2 scalar
            ],
            out_specs=pl.BlockSpec((1, T, 2 * C), lambda b, t: (b, t, 0)),
        ),
        compiler_params=pltpu.CompilerParams(
            dimension_semantics=("parallel", "parallel"),
            vmem_limit_bytes=vmem_limit),
    )(upre_f, upost_f, icha_in, vmat_in, b2_in)

    return out.reshape(B, H, W, 2 * C)


def cross_mix_reference(upre, upost, w1, b1, w2, b2):
    """Pure-JAX mirror of the PyTorch Cross_mix.forward (math in f32)."""
    f32 = jnp.float32
    upre = upre.astype(f32)
    upost = upost.astype(f32)
    C = upre.shape[-1]
    pooled = jnp.concatenate([upre.mean(axis=(1, 2)), upost.mean(axis=(1, 2))], axis=1)
    icha = jax.nn.sigmoid(pooled @ w1.astype(f32) + b1.astype(f32))   # (B, 2C)
    icha_pre = icha[:, None, None, :C]
    icha_post = icha[:, None, None, C:]
    uchapre = upost * icha_pre + upre
    uchapost = upre * icha_post + upost
    w2 = w2.astype(f32)
    logit = (jnp.sum(uchapre * w2[:C], axis=-1, keepdims=True)
             + jnp.sum(uchapost * w2[C:], axis=-1, keepdims=True)
             + b2.astype(f32)[0])
    ispa = jax.nn.sigmoid(logit)
    uspapre = uchapost * ispa + upre
    uspapost = uchapre * ispa + upost
    return jnp.concatenate([uspapre, uspapost], axis=3)


def _run_case(key, *, B, H, W, C, dtype, tol):
    k1, k2, k3, k4, k5, k6 = jax.random.split(key, 6)
    upre = jax.random.normal(k1, (B, H, W, C), jnp.float32).astype(dtype)
    upost = jax.random.normal(k2, (B, H, W, C), jnp.float32).astype(dtype)
    # 1x1-conv parameters in matmul-friendly layout.
    w1 = jax.random.normal(k3, (2 * C, 2 * C), jnp.float32) * 0.1    # proj1.weight^T
    b1 = jax.random.normal(k4, (2 * C,), jnp.float32) * 0.1          # proj1.bias
    w2 = jax.random.normal(k5, (2 * C,), jnp.float32) * 0.1          # proj2.weight
    b2 = jax.random.normal(k6, (1,), jnp.float32) * 0.1              # proj2.bias

    out = cross_mix(upre, upost, w1, b1, w2, b2)
    out = jax.block_until_ready(out)
    assert out.shape == (B, H, W, 2 * C), out.shape
    assert out.dtype == dtype, out.dtype

    ref = cross_mix_reference(upre, upost, w1, b1, w2, b2)
    err = float(jnp.max(jnp.abs(out.astype(jnp.float32) - ref)))
    assert err < tol, f"mismatch vs reference: max abs err {err} (tol {tol})"


if __name__ == "__main__":
    key = jax.random.PRNGKey(0)
    k_a, k_b, k_c = jax.random.split(key, 3)

    # Small base case (in_chans=4, image 8x8, batch 2).
    _run_case(k_a, B=2, H=8, W=8, C=4, dtype=jnp.float32, tol=1e-4)
    # Spatially tiled case: HW=1600 -> two 800-row tiles per batch element.
    _run_case(k_b, B=2, H=40, W=40, C=8, dtype=jnp.float32, tol=1e-4)
    # bf16 I/O (f32 gating math in-kernel, bf16 loads/stores).
    _run_case(k_c, B=2, H=16, W=16, C=8, dtype=jnp.bfloat16, tol=5e-2)

    print("KERNEL_OK")
</pallas_src>

<mosaic_0001>
module attributes {stable_mosaic.version = 11 : i64} {
  func.func @_cross_mix_kernel(%arg0: i32, %arg1: i32, %arg2: memref<1x64x4xf32, #tpu.memory_space<vmem>>, %arg3: memref<1x64x4xf32, #tpu.memory_space<vmem>>, %arg4: memref<1x2x4xf32, #tpu.memory_space<vmem>>, %arg5: memref<1x4x2xf32, #tpu.memory_space<vmem>>, %arg6: memref<1xf32, #tpu.memory_space<smem>>, %arg7: memref<1x64x8xf32, #tpu.memory_space<vmem>>) attributes {dimension_semantics = [#tpu.dimension_semantics<parallel>, #tpu.dimension_semantics<parallel>], iteration_bounds = array<i64: 2, 1>, scalar_prefetch = 0 : i64, scratch_operands = 0 : i64, tpu.core_type = #tpu.core_type<tc>, window_params = [{transform_indices = @transform_0, window_bounds = array<i64: 1, 64, 4>}, {transform_indices = @transform_1, window_bounds = array<i64: 1, 64, 4>}, {transform_indices = @transform_2, window_bounds = array<i64: 1, 2, 4>}, {transform_indices = @transform_3, window_bounds = array<i64: 1, 4, 2>}, {transform_indices = @transform_4, window_bounds = array<i64: 1>}, {transform_indices = @transform_5, window_bounds = array<i64: 1, 64, 8>}]} {
    %c0 = arith.constant 0 : index
    %c0_0 = arith.constant 0 : index
    %c0_1 = arith.constant 0 : index
    %0 = vector.load %arg2[%c0, %c0_0, %c0_1] : memref<1x64x4xf32, #tpu.memory_space<vmem>>, vector<1x64x4xf32>
    %1 = vector.shape_cast %0 : vector<1x64x4xf32> to vector<64x4xf32>
    %c0_2 = arith.constant 0 : index
    %c0_3 = arith.constant 0 : index
    %c0_4 = arith.constant 0 : index
    %2 = vector.load %arg3[%c0_2, %c0_3, %c0_4] : memref<1x64x4xf32, #tpu.memory_space<vmem>>, vector<1x64x4xf32>
    %3 = vector.shape_cast %2 : vector<1x64x4xf32> to vector<64x4xf32>
    %c0_5 = arith.constant 0 : index
    %c0_6 = arith.constant 0 : index
    %c0_7 = arith.constant 0 : index
    %4 = vector.load %arg4[%c0_5, %c0_6, %c0_7] : memref<1x2x4xf32, #tpu.memory_space<vmem>>, vector<1x1x4xf32>
    %5 = vector.shape_cast %4 : vector<1x1x4xf32> to vector<1x4xf32>
    %c0_8 = arith.constant 0 : index
    %c1 = arith.constant 1 : index
    %c0_9 = arith.constant 0 : index
    %6 = vector.load %arg4[%c0_8, %c1, %c0_9] : memref<1x2x4xf32, #tpu.memory_space<vmem>>, vector<1x1x4xf32>
    %7 = vector.shape_cast %6 : vector<1x1x4xf32> to vector<1x4xf32>
    %8 = vector.broadcast %5 : vector<1x4xf32> to vector<64x4xf32>
    %9 = arith.mulf %3, %8 : vector<64x4xf32>
    %10 = arith.addf %9, %1 : vector<64x4xf32>
    %11 = vector.broadcast %7 : vector<1x4xf32> to vector<64x4xf32>
    %12 = arith.mulf %1, %11 : vector<64x4xf32>
    %13 = arith.addf %12, %3 : vector<64x4xf32>
    %c0_10 = arith.constant 0 : index
    %c0_11 = arith.constant 0 : index
    %c0_12 = arith.constant 0 : index
    %14 = vector.load %arg5[%c0_10, %c0_11, %c0_12] : memref<1x4x2xf32, #tpu.memory_space<vmem>>, vector<1x4x1xf32>
    %15 = vector.shape_cast %14 : vector<1x4x1xf32> to vector<4x1xf32>
    %cst = arith.constant dense<0.000000e+00> : vector<64x1xf32>
    %16 = tpu.matmul %1, %15, %cst {dimension_numbers = #tpu.dot_dimension_numbers<[1], [0], [0], [1], [0, 0, 1, 1], [], []>, precision = #tpu.contract_precision<fp32>} : vector<64x4xf32>, vector<4x1xf32>, vector<64x1xf32> -> vector<64x1xf32>
    %c0_13 = arith.constant 0 : index
    %c0_14 = arith.constant 0 : index
    %c1_15 = arith.constant 1 : index
    %17 = vector.load %arg5[%c0_13, %c0_14, %c1_15] : memref<1x4x2xf32, #tpu.memory_space<vmem>>, vector<1x4x1xf32>
    %18 = vector.shape_cast %17 : vector<1x4x1xf32> to vector<4x1xf32>
    %cst_16 = arith.constant dense<0.000000e+00> : vector<64x1xf32>
    %19 = tpu.matmul %3, %18, %cst_16 {dimension_numbers = #tpu.dot_dimension_numbers<[1], [0], [0], [1], [0, 0, 1, 1], [], []>, precision = #tpu.contract_precision<fp32>} : vector<64x4xf32>, vector<4x1xf32>, vector<64x1xf32> -> vector<64x1xf32>
    %20 = arith.addf %16, %19 : vector<64x1xf32>
    %c0_17 = arith.constant 0 : index
    %21 = memref.load %arg6[%c0_17] : memref<1xf32, #tpu.memory_space<smem>>
    %22 = vector.broadcast %21 : f32 to vector<64x1xf32>
    %23 = arith.addf %20, %22 : vector<64x1xf32>
    %24 = arith.negf %23 : vector<64x1xf32>
    %25 = math.exp %24 : vector<64x1xf32>
    %cst_18 = arith.constant 1.000000e+00 : f32
    %26 = vector.broadcast %cst_18 : f32 to vector<64x1xf32>
    %27 = arith.addf %26, %25 : vector<64x1xf32>
    %28 = arith.divf %26, %27 : vector<64x1xf32>
    %29 = vector.broadcast %28 : vector<64x1xf32> to vector<64x4xf32>
    %30 = arith.mulf %13, %29 : vector<64x4xf32>
    %31 = arith.addf %30, %1 : vector<64x4xf32>
    %32 = vector.broadcast %28 : vector<64x1xf32> to vector<64x4xf32>
    %33 = arith.mulf %10, %32 : vector<64x4xf32>
    %34 = arith.addf %33, %3 : vector<64x4xf32>
    %35 = tpu.concatenate %31, %34 in 1 : vector<64x4xf32>, vector<64x4xf32> -> vector<64x8xf32>
    %c0_19 = arith.constant 0 : index
    %c0_20 = arith.constant 0 : index
    %c0_21 = arith.constant 0 : index
    %36 = vector.load %arg7[%c0_19, %c0_20, %c0_21] : memref<1x64x8xf32, #tpu.memory_space<vmem>>, vector<1x64x8xf32>
    %37 = vector.shape_cast %36 : vector<1x64x8xf32> to vector<64x8xf32>
    %38 = vector.shape_cast %35 : vector<64x8xf32> to vector<1x64x8xf32>
    tpu.vector_store %arg7[%c0_19, %c0_20, %c0_21], %38 {strides = array<i32>} : memref<1x64x8xf32, #tpu.memory_space<vmem>>, vector<1x64x8xf32>,
    return
  }
  func.func @transform_0(%arg0: i32, %arg1: i32) -> (i32, i32, i32) {
    %c0_i32 = arith.constant 0 : i32
    %c0_i32_0 = arith.constant 0 : i32
    return %arg0, %arg1, %c0_i32 : i32, i32, i32
  }
  func.func @transform_1(%arg0: i32, %arg1: i32) -> (i32, i32, i32) {
    %c0_i32 = arith.constant 0 : i32
    %c0_i32_0 = arith.constant 0 : i32
    return %arg0, %arg1, %c0_i32 : i32, i32, i32
  }
  func.func @transform_2(%arg0: i32, %arg1: i32) -> (i32, i32, i32) {
    %c0_i32 = arith.constant 0 : i32
    %c0_i32_0 = arith.constant 0 : i32
    %c0_i32_1 = arith.constant 0 : i32
    return %arg0, %c0_i32, %c0_i32_0 : i32, i32, i32
  }
  func.func @transform_3(%arg0: i32, %arg1: i32) -> (i32, i32, i32) {
    %c0_i32 = arith.constant 0 : i32
    %c0_i32_0 = arith.constant 0 : i32
    %c0_i32_1 = arith.constant 0 : i32
    return %arg0, %c0_i32, %c0_i32_0 : i32, i32, i32
  }
  func.func @transform_4(%arg0: i32, %arg1: i32) -> i32 {
    %c0_i32 = arith.constant 0 : i32
    %c0_i32_0 = arith.constant 0 : i32
    return %c0_i32 : i32
  }
  func.func @transform_5(%arg0: i32, %arg1: i32) -> (i32, i32, i32) {
    %c0_i32 = arith.constant 0 : i32
    %c0_i32_0 = arith.constant 0 : i32
    return %arg0, %arg1, %c0_i32 : i32, i32, i32
  }
}

</mosaic_0001>

<llo_original>
// kernel: tpu_custom_call.1
$region0: #{tpu_custom_call.1}
  #allocation0 [shape = 'u32[]', space=smem, size = 0x4, offset = 0x4, fixed_abs, tag = 'smem constant byte address 0x4 - core index']
  #allocation1 [shape = 'u32[144,128]{1,0:T(1,128)}', space=vmem, size = 0x12000, scoped, tag = 'internal scratch']
  #allocation2 [shape = 'f32[1]{0:T(128)S(6)}', space=smem, size = 0x200, scoped, tag = 'scoped memory for tpu_custom_call.1']
  %s0 = inlined_call_operand.vmem [shape: f32[2,64,4], index: 0, kind: input, shape index: {}]
  %s1 = inlined_call_operand.vmem [shape: f32[2,64,4], index: 1, kind: input, shape index: {}]
  %s2 = inlined_call_operand.vmem [shape: f32[2,2,4], index: 2, kind: input, shape index: {}]
  %s3 = inlined_call_operand.vmem [shape: f32[2,4,2], index: 3, kind: input, shape index: {}]
  %s4 = inlined_call_operand.<no memory space> [shape: f32[1], index: 4, kind: input, shape index: {}]
  %s5 = inlined_call_operand.vmem [shape: f32[2,64,8], index: 5, kind: output, shape index: {}]
  %s6 = sld [smem:[#allocation0]]
  $region53: #{tpu_custom_call.1} parent=0
    _
  %s8 = ssub.s32 1, %s6
  %s9 = scalar_select 0, %s8, %s6
  %10 = sst [smem:[#allocation2]] %s4
  loop: start=0, step=1, limit=4
  $region2: #{tpu_custom_call.1} parent=0 // loop_pre_header
    _
  $region3: #{tpu_custom_call.1} parent=0 // loop_header
    %s12 = sphi 0, %s16
    %p13 = scmp.ge.s32.totalorder %s12, 4
    %s19 = sphi 0, %s31
    %s20 = sphi 0, %s27
    %s21 = sphi 0, %s19
    %s22 = sphi 0, %s20
    %s23 = sphi 0, %s21
    %s24 = sphi 0, %s22
    %s36 = sphi 0, %s38
    %s39 = sphi 0, %s36
    %s40 = sphi 0, %s39
    %s56 = sphi 0, %s40
    %s64 = sphi 0, %s66
    %s67 = sphi 0, %s64
    %s68 = sphi 0, %s67
    %s84 = sphi 0, %s68
    %s90 = sphi 0, %s92
    %s93 = sphi 0, %s90
    %s94 = sphi 0, %s93
    %s110 = sphi 0, %s94
    %s116 = sphi 0, %s118
    %s119 = sphi 0, %s116
    %s120 = sphi 0, %s119
    %s136 = sphi 0, %s120
    %s140 = sphi 0, %s140
    %s142 = sphi 0, %s140
    %s143 = sphi 0, %s142
    %s157 = sphi 0, %s143
    %s165 = sphi 0, %s167
    %s168 = sphi 0, %s165
    %s169 = sphi 0, %s168
    %s185 = sphi 0, %s169
  $region4: #{tpu_custom_call.1} parent=0 // loop_header_branch
    %15 = sbr.rel (%p13) target = $region8
  $region5: #{tpu_custom_call.1} parent=0 // loop_body
    %s17 = ssub.s32 %s12, 1
    %s18 = ssub.s32 %s12, 2
    %s25 = sadd.s32 1, %s20
    %p26 = scmp.ge.s32.totalorder %s25, 1
    %s27 = scalar_select %p26, 0, %s25
    %s28 = sadd.s32 1, %s19
    %s29 = scalar_select %p26, %s28, %s19
    %p30 = scmp.ge.s32.totalorder %s29, 2
    %s31 = scalar_select %p30, 0, %s29
    %s32 = ssub.s32 %s19, %s31
    %s33 = ssub.s32 %s20, %s27
    %s34 = sor.u32 %s32, %s33
    %p35 = scmp.eq.s32.totalorder %s34, 0
    %s37 = sadd.s32 %s36, 1
    %s38 = scalar_select %p35, %s36, %s37
    %p41 = pneg %p35
    %p42 = scmp.eq.s32.totalorder %s12, 1
    %p43 = por %p41, %p42
    %p44 = scmp.ne.s32.totalorder %s36, %s39
    %p45 = scmp.eq.s32.totalorder %s12, 0
    %p46 = por %p44, %p45
    %p47 = scmp.ne.s32.totalorder %s36, %s39
    %p48 = scmp.eq.s32.totalorder %s17, 1
    %p49 = por %p47, %p48
    %p50 = scmp.ne.s32.totalorder %s39, %s40
    %p51 = scmp.eq.s32.totalorder %s17, 0
    %p52 = por %p50, %p51
    %p53 = scmp.ne.s32.totalorder %s39, %s40
    %p54 = scmp.eq.s32.totalorder %s18, 1
    %p55 = por %p53, %p54
    %p57 = scmp.ne.s32.totalorder %s40, %s56
    %p58 = scmp.eq.s32.totalorder %s18, 0
    %p59 = por %p57, %p58
    %s60 = ssub.s32 %s19, %s31
    %s61 = ssub.s32 %s20, %s27
    %s62 = sor.u32 %s60, %s61
    %p63 = scmp.eq.s32.totalorder %s62, 0
    %s65 = sadd.s32 %s64, 1
    %s66 = scalar_select %p63, %s64, %s65
    %p69 = pneg %p63
    %p70 = scmp.eq.s32.totalorder %s12, 1
    %p71 = por %p69, %p70
    %p72 = scmp.ne.s32.totalorder %s64, %s67
    %p73 = scmp.eq.s32.totalorder %s12, 0
    %p74 = por %p72, %p73
    %p75 = scmp.ne.s32.totalorder %s64, %s67
    %p76 = scmp.eq.s32.totalorder %s17, 1
    %p77 = por %p75, %p76
    %p78 = scmp.ne.s32.totalorder %s67, %s68
    %p79 = scmp.eq.s32.totalorder %s17, 0
    %p80 = por %p78, %p79
    %p81 = scmp.ne.s32.totalorder %s67, %s68
    %p82 = scmp.eq.s32.totalorder %s18, 1
    %p83 = por %p81, %p82
    %p85 = scmp.ne.s32.totalorder %s68, %s84
    %p86 = scmp.eq.s32.totalorder %s18, 0
    %p87 = por %p85, %p86
    %s88 = ssub.s32 %s19, %s31
    %p89 = scmp.eq.s32.totalorder %s88, 0
    %s91 = sadd.s32 %s90, 1
    %s92 = scalar_select %p89, %s90, %s91
    %p95 = pneg %p89
    %p96 = scmp.eq.s32.totalorder %s12, 1
    %p97 = por %p95, %p96
    %p98 = scmp.ne.s32.totalorder %s90, %s93
    %p99 = scmp.eq.s32.totalorder %s12, 0
    %p100 = por %p98, %p99
    %p101 = scmp.ne.s32.totalorder %s90, %s93
    %p102 = scmp.eq.s32.totalorder %s17, 1
    %p103 = por %p101, %p102
    %p104 = scmp.ne.s32.totalorder %s93, %s94
    %p105 = scmp.eq.s32.totalorder %s17, 0
    %p106 = por %p104, %p105
    %p107 = scmp.ne.s32.totalorder %s93, %s94
    %p108 = scmp.eq.s32.totalorder %s18, 1
    %p109 = por %p107, %p108
    %p111 = scmp.ne.s32.totalorder %s94, %s110
    %p112 = scmp.eq.s32.totalorder %s18, 0
    %p113 = por %p111, %p112
    %s114 = ssub.s32 %s19, %s31
    %p115 = scmp.eq.s32.totalorder %s114, 0
    %s117 = sadd.s32 %s116, 1
    %s118 = scalar_select %p115, %s116, %s117
    %p121 = pneg %p115
    %p122 = scmp.eq.s32.totalorder %s12, 1
    %p123 = por %p121, %p122
    %p124 = scmp.ne.s32.totalorder %s116, %s119
    %p125 = scmp.eq.s32.totalorder %s12, 0
    %p126 = por %p124, %p125
    %p127 = scmp.ne.s32.totalorder %s116, %s119
    %p128 = scmp.eq.s32.totalorder %s17, 1
    %p129 = por %p127, %p128
    %p130 = scmp.ne.s32.totalorder %s119, %s120
    %p131 = scmp.eq.s32.totalorder %s17, 0
    %p132 = por %p130, %p131
    %p133 = scmp.ne.s32.totalorder %s119, %s120
    %p134 = scmp.eq.s32.totalorder %s18, 1
    %p135 = por %p133, %p134
    %p137 = scmp.ne.s32.totalorder %s120, %s136
    %p138 = scmp.eq.s32.totalorder %s18, 0
    %p139 = por %p137, %p138
    %s141 = sadd.s32 %s140, 1
    %p144 = scmp.eq.s32.totalorder %s12, 1
    %p145 = scmp.ne.s32.totalorder %s140, %s142
    %p146 = scmp.eq.s32.totalorder %s12, 0
    %p147 = por %p145, %p146
    %p148 = scmp.ne.s32.totalorder %s140, %s142
    %p149 = scmp.eq.s32.totalorder %s17, 1
    %p150 = por %p148, %p149
    %p151 = scmp.ne.s32.totalorder %s142, %s143
    %p152 = scmp.eq.s32.totalorder %s17, 0
    %p153 = por %p151, %p152
    %p154 = scmp.ne.s32.totalorder %s142, %s143
    %p155 = scmp.eq.s32.totalorder %s18, 1
    %p156 = por %p154, %p155
    %p158 = scmp.ne.s32.totalorder %s143, %s157
    %p159 = scmp.eq.s32.totalorder %s18, 0
    %p160 = por %p158, %p159
    %s161 = ssub.s32 %s19, %s31
    %s162 = ssub.s32 %s20, %s27
    %s163 = sor.u32 %s161, %s162
    %p164 = scmp.eq.s32.totalorder %s163, 0
    %s166 = sadd.s32 %s165, 1
    %s167 = scalar_select %p164, %s165, %s166
    %p170 = pneg %p164
    %p171 = scmp.eq.s32.totalorder %s12, 1
    %p172 = por %p170, %p171
    %p173 = scmp.ne.s32.totalorder %s165, %s168
    %p174 = scmp.eq.s32.totalorder %s12, 0
    %p175 = por %p173, %p174
    %p176 = scmp.ne.s32.totalorder %s165, %s168
    %p177 = scmp.eq.s32.totalorder %s17, 1
    %p178 = por %p176, %p177
    %p179 = scmp.ne.s32.totalorder %s168, %s169
    %p180 = scmp.eq.s32.totalorder %s17, 0
    %p181 = por %p179, %p180
    %p182 = scmp.ne.s32.totalorder %s168, %s169
    %p183 = scmp.eq.s32.totalorder %s18, 1
    %p184 = por %p182, %p183
    %p186 = scmp.ne.s32.totalorder %s169, %s185
    %p187 = scmp.eq.s32.totalorder %s18, 0
    %p188 = por %p186, %p187
    %p189 = scmp.le.s32.totalorder 1, %s12
    %p190 = scmp.lt.s32.totalorder %s12, 3
    %p191 = pnand %p189, %p190
    %p192 = pneg %p191
    // Predicated region
    $region9: #{tpu_custom_call.1} parent=5 // pred_check
      _
    $region10: #{tpu_custom_call.1} parent=5 // pred_check_branch
      %194 = sbr.rel (%p191) target = $region12
    $region11: #{tpu_custom_call.1} parent=5 // pred_region
      %s195 = ssub.s32 %s12, 1
      // Predicated region
      $region13: #{tpu_custom_call.1} parent=11 // pred_check
        %p196 = pneg %p153
      $region14: #{tpu_custom_call.1} parent=11 // pred_check_branch
        %198 = sbr.rel (%p196) target = $region16
      $region15: #{tpu_custom_call.1} parent=11 // pred_region
        _
      $region16: #{tpu_custom_call.1} parent=11 // pred_fallthru
        _
    $region12: #{tpu_custom_call.1} parent=5 // pred_fallthru
      _
    %p199 = scmp.lt.s32.totalorder %s12, 2
    // Predicated region
    $region17: #{tpu_custom_call.1} parent=5 // pred_check
      %p200 = pneg %p199
    $region18: #{tpu_custom_call.1} parent=5 // pred_check_branch
      %202 = sbr.rel (%p200) target = $region20
    $region19: #{tpu_custom_call.1} parent=5 // pred_region
      // Predicated region
      $region21: #{tpu_custom_call.1} parent=19 // pred_check
        %p203 = pneg %p46
      $region22: #{tpu_custom_call.1} parent=19 // pred_check_branch
        %205 = sbr.rel (%p203) target = $region24
      $region23: #{tpu_custom_call.1} parent=19 // pred_region
        %s206 = smul.u32 8, %s20
        %p207 = scmp.lt.s32.totalorder %s19, 1
        %s208 = scalar_select %p207, %s19, 1
        %p209 = scmp.lt.s32.totalorder %s206, 7
        %s210 = scalar_select %p209, %s206, 7
        %s211 = smul.addr %s208, 8
        %s212 = sadd.s32 %s210, %s211
        %s213 = smul.addr %s212, 8
        %s214 = scalar_lea.vmem %s0, %s213
        %s215 = smul.u32 8, %s20
      $region24: #{tpu_custom_call.1} parent=19 // pred_fallthru
        _
      // Predicated region
      $region25: #{tpu_custom_call.1} parent=19 // pred_check
        %p216 = pneg %p74
      $region26: #{tpu_custom_call.1} parent=19 // pred_check_branch
        %218 = sbr.rel (%p216) target = $region28
      $region27: #{tpu_custom_call.1} parent=19 // pred_region
        %s219 = smul.u32 8, %s20
        %p220 = scmp.lt.s32.totalorder %s19, 1
        %s221 = scalar_select %p220, %s19, 1
        %p222 = scmp.lt.s32.totalorder %s219, 7
        %s223 = scalar_select %p222, %s219, 7
        %s224 = smul.addr %s221, 8
        %s225 = sadd.s32 %s223, %s224
        %s226 = smul.addr %s225, 8
        %s227 = scalar_lea.vmem %s1, %s226
        %s228 = smul.u32 8, %s20
      $region28: #{tpu_custom_call.1} parent=19 // pred_fallthru
        _
      // Predicated region
      $region29: #{tpu_custom_call.1} parent=19 // pred_check
        %p229 = pneg %p100
      $region30: #{tpu_custom_call.1} parent=19 // pred_check_branch
        %231 = sbr.rel (%p229) target = $region32
      $region31: #{tpu_custom_call.1} parent=19 // pred_region
        %p232 = scmp.lt.s32.totalorder %s19, 1
        %s233 = scalar_select %p232, %s19, 1
        %s234 = smul.addr %s233, 2
        %s235 = scalar_lea.vmem %s2, %s234
      $region32: #{tpu_custom_call.1} parent=19 // pred_fallthru
        _
      // Predicated region
      $region33: #{tpu_custom_call.1} parent=19 // pred_check
        %p236 = pneg %p126
      $region34: #{tpu_custom_call.1} parent=19 // pred_check_branch
        %238 = sbr.rel (%p236) target = $region36
      $region35: #{tpu_custom_call.1} parent=19 // pred_region
        %p239 = scmp.lt.s32.totalorder %s19, 1
        %s240 = scalar_select %p239, %s19, 1
        %s241 = smul.addr %s240, 4
        %s242 = scalar_lea.vmem %s3, %s241
      $region36: #{tpu_custom_call.1} parent=19 // pred_fallthru
        _
    $region20: #{tpu_custom_call.1} parent=5 // pred_fallthru
      _
    %p243 = scmp.le.s32.totalorder 1, %s12
    %p244 = scmp.lt.s32.totalorder %s12, 3
    %p245 = pnand %p243, %p244
    %p246 = pneg %p245
    // Predicated region
    $region37: #{tpu_custom_call.1} parent=5 // pred_check
      _
    $region38: #{tpu_custom_call.1} parent=5 // pred_check_branch
      %248 = sbr.rel (%p245) target = $region40
    $region39: #{tpu_custom_call.1} parent=5 // pred_region
      %s249 = ssub.s32 %s12, 1
      %s250 = smul.u32 8, %s22
      %p251 = scmp.lt.s32.totalorder %s21, 1
      %s252 = scalar_select %p251, %s21, 1
      %p253 = scmp.lt.s32.totalorder %s250, 7
      %s254 = scalar_select %p253, %s250, 7
      %s255 = smul.addr %s252, 8
      %s256 = sadd.s32 %s254, %s255
      %s257 = smul.addr %s256, 8
      %s258 = scalar_lea.vmem %s0, %s257
      %p259 = pneg %p52
      %p260 = pneg %p49
      %s261 = smul.u32 8, %s22
      %p262 = scmp.lt.s32.totalorder %s21, 1
      %s263 = scalar_select %p262, %s21, 1
      %p264 = scmp.lt.s32.totalorder %s261, 7
      %s265 = scalar_select %p264, %s261, 7
      %s266 = smul.addr %s263, 8
      %s267 = sadd.s32 %s265, %s266
      %s268 = smul.addr %s267, 8
      %s269 = scalar_lea.vmem %s1, %s268
      %p270 = pneg %p80
      %p271 = pneg %p77
      %p272 = scmp.lt.s32.totalorder %s21, 1
      %s273 = scalar_select %p272, %s21, 1
      %s274 = smul.addr %s273, 2
      %s275 = scalar_lea.vmem %s2, %s274
      %p276 = pneg %p106
      %p277 = pneg %p103
      %p278 = scmp.lt.s32.totalorder %s21, 1
      %s279 = scalar_select %p278, %s21, 1
      %s280 = smul.addr %s279, 4
      %s281 = scalar_lea.vmem %s3, %s280
      %p282 = pneg %p132
      %p283 = pneg %p129
      %p284 = pneg %p153
      %p285 = pneg %p150
      %p286 = pneg %p181
      %p287 = pneg %p178
      %s288 = smul.u32 8, %s22
      %p289 = scmp.lt.s32.totalorder %s21, 1
      %s290 = scalar_select %p289, %s21, 1
      %p291 = scmp.lt.s32.totalorder %s288, 7
      %s292 = scalar_select %p291, %s288, 7
      %s293 = smul.addr %s290, 8
      %s294 = sadd.s32 %s292, %s293
      %s295 = smul.addr %s294, 8
      %s296 = scalar_lea.vmem %s5, %s295
      %s297 = smul.u32 8, %s22
      %p298 = scmp.lt.s32.totalorder %s21, 1
      %s299 = scalar_select %p298, %s21, 1
      %p300 = scmp.lt.s32.totalorder %s297, 7
      %s301 = scalar_select %p300, %s297, 7
      %s302 = smul.addr %s299, 8
      %s303 = sadd.s32 %s301, %s302
      %s304 = smul.addr %s303, 8
      %s305 = scalar_lea.vmem %s0, %s304
      %s306 = smul.u32 8, %s22
      %s307 = smul.u32 8, %s22
      %p308 = scmp.lt.s32.totalorder %s21, 1
      %s309 = scalar_select %p308, %s21, 1
      %p310 = scmp.lt.s32.totalorder %s307, 7
      %s311 = scalar_select %p310, %s307, 7
      %s312 = smul.addr %s309, 8
      %s313 = sadd.s32 %s311, %s312
      %s314 = smul.addr %s313, 8
      %s315 = scalar_lea.vmem %s1, %s314
      %s316 = smul.u32 8, %s22
      %p317 = scmp.lt.s32.totalorder %s21, 1
      %s318 = scalar_select %p317, %s21, 1
      %s319 = smul.addr %s318, 2
      %s320 = scalar_lea.vmem %s2, %s319
      %p321 = scmp.lt.s32.totalorder %s21, 1
      %s322 = scalar_select %p321, %s21, 1
      %s323 = smul.addr %s322, 4
      %s324 = scalar_lea.vmem %s3, %s323
      %s325 = smul.u32 8, %s22
      %p326 = scmp.lt.s32.totalorder %s21, 1
      %s327 = scalar_select %p326, %s21, 1
      %p328 = scmp.lt.s32.totalorder %s325, 7
      %s329 = scalar_select %p328, %s325, 7
      %s330 = smul.addr %s327, 8
      %s331 = sadd.s32 %s329, %s330
      %s332 = smul.addr %s331, 8
      %s333 = scalar_lea.vmem %s5, %s332
      %s334 = smul.u32 8, %s22
      %v335 = vld [vmem:[%s305] sm:$0xff]
      %v336 = vld [vmem:[%s305 + $0x8] sm:$0xff]
      %v337 = vld [vmem:[%s305 + $0x10] sm:$0xff]
      %v338 = vld [vmem:[%s305 + $0x18] sm:$0xff]
      %v339 = vld [vmem:[%s305 + $0x20] sm:$0xff]
      %v340 = vld [vmem:[%s305 + $0x28] sm:$0xff]
      %v341 = vld [vmem:[%s305 + $0x30] sm:$0xff]
      %v342 = vld [vmem:[%s305 + $0x38] sm:$0xff]
      %v343 = vld [vmem:[%s315] sm:$0xff]
      %v344 = vld [vmem:[%s315 + $0x8] sm:$0xff]
      %v345 = vld [vmem:[%s315 + $0x10] sm:$0xff]
      %v346 = vld [vmem:[%s315 + $0x18] sm:$0xff]
      %v347 = vld [vmem:[%s315 + $0x20] sm:$0xff]
      %v348 = vld [vmem:[%s315 + $0x28] sm:$0xff]
      %v349 = vld [vmem:[%s315 + $0x30] sm:$0xff]
      %v350 = vld [vmem:[%s315 + $0x38] sm:$0xff]
      %v351 = vld [vmem:[%s320] sm:$0x1]
      %v352 = vld [vmem:[%s320 + $0x1] sm:$0x1]
      %v353 = vlaneseq
      %v354 = vshrl.u32 %v353, 7
      %v355 = vsub.s32 0, %v354
      %v356 = vrot.slane %v351, %v355
      %v357 = vmul.f32 %v343, %v356
      %v358 = vmul.f32 %v344, %v356
      %v359 = vmul.f32 %v345, %v356
      %v360 = vmul.f32 %v346, %v356
      %v361 = vmul.f32 %v347, %v356
      %v362 = vmul.f32 %v348, %v356
      %v363 = vmul.f32 %v349, %v356
      %v364 = vmul.f32 %v350, %v356
      %v365 = vadd.f32 %v357, %v335
      %v366 = vadd.f32 %v358, %v336
      %v367 = vadd.f32 %v359, %v337
      %v368 = vadd.f32 %v360, %v338
      %v369 = vadd.f32 %v361, %v339
      %v370 = vadd.f32 %v362, %v340
      %v371 = vadd.f32 %v363, %v341
      %v372 = vadd.f32 %v364, %v342
      %v373 = vlaneseq
      %v374 = vshrl.u32 %v373, 7
      %v375 = vsub.s32 0, %v374
      %v376 = vrot.slane %v352, %v375
      %v377 = vmul.f32 %v335, %v376
      %v378 = vmul.f32 %v336, %v376
      %v379 = vmul.f32 %v337, %v376
      %v380 = vmul.f32 %v338, %v376
      %v381 = vmul.f32 %v339, %v376
      %v382 = vmul.f32 %v340, %v376
      %v383 = vmul.f32 %v341, %v376
      %v384 = vmul.f32 %v342, %v376
      %v385 = vadd.f32 %v377, %v343
      %v386 = vadd.f32 %v378, %v344
      %v387 = vadd.f32 %v379, %v345
      %v388 = vadd.f32 %v380, %v346
      %v389 = vadd.f32 %v381, %v347
      %v390 = vadd.f32 %v382, %v348
      %v391 = vadd.f32 %v383, %v349
      %v392 = vadd.f32 %v384, %v350
      %v393 = vld [vmem:[%s324] sm:$0xf]
      %395 = vrot.lane.b32.xlu0 %v393, 127
      %v396 = vpop.permute.xlu0 %395
      %vm397 = vcmask 31744
      %v399 = vsel %vm397, %v343, 0
      %v402 = vsel %vm397, %v344, 0
      %v405 = vsel %vm397, %v345, 0
      %v408 = vsel %vm397, %v346, 0
      %v411 = vsel %vm397, %v347, 0
      %v414 = vsel %vm397, %v348, 0
      %v417 = vsel %vm397, %v349, 0
      %v420 = vsel %vm397, %v350, 0
      %vm422 = vcmask 1043456
      %v423 = vsel %vm422, %v396, 0
      %425 = vmatprep.subr.mxu0 0.0
      %v426 = vand.u32 %v423, 4294901760
      %427 = vmatpush1.msra.mxu0 %v426
      %428 = vmatprep.subr.mxu0 0.0
      %429 = vmatpush1.msra.mxu0 0.0
      %430 = vmatprep.subr.mxu0 0.0
      %431 = vmatpush1.msra.mxu0 0.0
      %432 = vmatprep.subr.mxu0 0.0
      %433 = vmatpush1.msra.mxu0 0.0
      %434 = vmatprep.subr.mxu0 0.0
      %435 = vmatpush1.msra.mxu0 0.0
      %436 = vmatprep.subr.mxu0 0.0
      %437 = vmatpush1.msra.mxu0 0.0
      %438 = vmatprep.subr.mxu0 0.0
      %439 = vmatpush1.msra.mxu0 0.0
      %440 = vmatprep.subr.mxu0 0.0
      %441 = vmatpush1.msra.mxu0 0.0
      %442 = vmatprep.subr.mxu0 0.0
      %443 = vmatpush1.msra.mxu0 0.0
      %444 = vmatprep.subr.mxu0 0.0
      %445 = vmatpush1.msra.mxu0 0.0
      %446 = vmatprep.subr.mxu0 0.0
      %447 = vmatpush1.msra.mxu0 0.0
      %448 = vmatprep.subr.mxu0 0.0
      %449 = vmatpush1.msra.mxu0 0.0
      %450 = vmatprep.subr.mxu0 0.0
      %451 = vmatpush1.msra.mxu0 0.0
      %452 = vmatprep.subr.mxu0 0.0
      %453 = vmatpush1.msra.mxu0 0.0
      %454 = vmatprep.subr.mxu0 0.0
      %455 = vmatpush1.msra.mxu0 0.0
      %456 = vmatprep.subr.mxu0 0.0
      %457 = vmatpush1.msra.mxu0 0.0
      %458 = vmatprep.subr.mxu0 0.0
      %459 = vmatpush1.msra.mxu0 0.0
      %460 = vmatprep.subr.mxu0 0.0
      %461 = vmatpush1.msra.mxu0 0.0
      %462 = vmatprep.subr.mxu0 0.0
      %463 = vmatpush1.msra.mxu0 0.0
      %464 = vmatprep.subr.mxu0 0.0
      %465 = vmatpush1.msra.mxu0 0.0
      %466 = vmatprep.subr.mxu0 0.0
      %467 = vmatpush1.msra.mxu0 0.0
      %468 = vmatprep.subr.mxu0 0.0
      %469 = vmatpush1.msra.mxu0 0.0
      %470 = vmatprep.subr.mxu0 0.0
      %471 = vmatpush1.msra.mxu0 0.0
      %472 = vmatprep.subr.mxu0 0.0
      %473 = vmatpush1.msra.mxu0 0.0
      %474 = vmatprep.subr.mxu0 0.0
      %475 = vmatpush1.msra.mxu0 0.0
      %476 = vmatprep.subr.mxu0 0.0
      %477 = vmatpush1.msra.mxu0 0.0
      %478 = vmatprep.subr.mxu0 0.0
      %479 = vmatpush1.msra.mxu0 0.0
      %480 = vmatprep.subr.mxu0 0.0
      %481 = vmatpush1.msra.mxu0 0.0
      %482 = vmatprep.subr.mxu0 0.0
      %483 = vmatpush1.msra.mxu0 0.0
      %484 = vmatprep.subr.mxu0 0.0
      %485 = vmatpush1.msra.mxu0 0.0
      %486 = vmatprep.subr.mxu0 0.0
      %487 = vmatpush1.msra.mxu0 0.0
      %488 = vmatprep.subr.mxu0 0.0
      %489 = vmatpush1.msra.mxu0 0.0
      %490 = vmatprep.mubr.f32.mxu0 0.0
      %v491 = vand.u32 %v399, 4294901760
      %v492 = vsub.f32 %v399, %v491
      %v493 = vand.u32 %v492, 4294901760
      %v494 = vsub.f32 %v492, %v493
      %v495 = vand.u32 %v494, 4294901760
      %496 = vmatmul.mubr.f32.gmra.mrb[0].mxu0 %v495
      %v497 = vpop.f32.mrb[0].mxu0
      %v498 = vadd.f32 0.0, %v497
      %v499 = vpop.f32.mrb[0].mxu0
      %500 = vmatprep.mubr.f32.mxu0 0.0
      %v501 = vand.u32 %v402, 4294901760
      %v502 = vsub.f32 %v402, %v501
      %v503 = vand.u32 %v502, 4294901760
      %v504 = vsub.f32 %v502, %v503
      %v505 = vand.u32 %v504, 4294901760
      %506 = vmatmul.mubr.f32.gmra.mrb[0].mxu0 %v505
      %v507 = vpop.f32.mrb[0].mxu0
      %v508 = vadd.f32 0.0, %v507
      %v509 = vpop.f32.mrb[0].mxu0
      %510 = vmatprep.mubr.f32.mxu0 0.0
      %v511 = vand.u32 %v405, 4294901760
      %v512 = vsub.f32 %v405, %v511
      %v513 = vand.u32 %v512, 4294901760
      %v514 = vsub.f32 %v512, %v513
      %v515 = vand.u32 %v514, 4294901760
      %516 = vmatmul.mubr.f32.gmra.mrb[0].mxu0 %v515
      %v517 = vpop.f32.mrb[0].mxu0
      %v518 = vadd.f32 0.0, %v517
      %v519 = vpop.f32.mrb[0].mxu0
      %520 = vmatprep.mubr.f32.mxu0 0.0
      %v521 = vand.u32 %v408, 4294901760
      %v522 = vsub.f32 %v408, %v521
      %v523 = vand.u32 %v522, 4294901760
      %v524 = vsub.f32 %v522, %v523
      %v525 = vand.u32 %v524, 4294901760
      %526 = vmatmul.mubr.f32.gmra.mrb[0].mxu0 %v525
      %v527 = vpop.f32.mrb[0].mxu0
      %v528 = vadd.f32 0.0, %v527
      %v529 = vpop.f32.mrb[0].mxu0
      %530 = vmatprep.mubr.f32.mxu0 0.0
      %v531 = vand.u32 %v411, 4294901760
      %v532 = vsub.f32 %v411, %v531
      %v533 = vand.u32 %v532, 4294901760
      %v534 = vsub.f32 %v532, %v533
      %v535 = vand.u32 %v534, 4294901760
      %536 = vmatmul.mubr.f32.gmra.mrb[0].mxu0 %v535
      %v537 = vpop.f32.mrb[0].mxu0
      %v538 = vadd.f32 0.0, %v537
      %v539 = vpop.f32.mrb[0].mxu0
      %540 = vmatprep.mubr.f32.mxu0 0.0
      %v541 = vand.u32 %v414, 4294901760
      %v542 = vsub.f32 %v414, %v541
      %v543 = vand.u32 %v542, 4294901760
      %v544 = vsub.f32 %v542, %v543
      %v545 = vand.u32 %v544, 4294901760
      %546 = vmatmul.mubr.f32.gmra.mrb[0].mxu0 %v545
      %v547 = vpop.f32.mrb[0].mxu0
      %v548 = vadd.f32 0.0, %v547
      %v549 = vpop.f32.mrb[0].mxu0
      %550 = vmatprep.mubr.f32.mxu0 0.0
      %v551 = vand.u32 %v417, 4294901760
      %v552 = vsub.f32 %v417, %v551
      %v553 = vand.u32 %v552, 4294901760
      %v554 = vsub.f32 %v552, %v553
      %v555 = vand.u32 %v554, 4294901760
      %556 = vmatmul.mubr.f32.gmra.mrb[0].mxu0 %v555
      %v557 = vpop.f32.mrb[0].mxu0
      %v558 = vadd.f32 0.0, %v557
      %v559 = vpop.f32.mrb[0].mxu0
      %560 = vmatprep.mubr.f32.mxu0 0.0
      %v561 = vand.u32 %v420, 4294901760
      %v562 = vsub.f32 %v420, %v561
      %v563 = vand.u32 %v562, 4294901760
      %v564 = vsub.f32 %v562, %v563
      %v565 = vand.u32 %v564, 4294901760
      %566 = vmatmul.mubr.f32.gmra.mrb[0].mxu0 %v565
      %v567 = vpop.f32.mrb[0].mxu0
      %v568 = vadd.f32 0.0, %v567
      %v569 = vpop.f32.mrb[0].mxu0
      %570 = vdwg.mxu0
      %571 = vmatprep.subr.mxu0 0.0
      %v572 = vand.u32 %v423, 4294901760
      %v573 = vsub.f32 %v423, %v572
      %v574 = vand.u32 %v573, 4294901760
      %v575 = vsub.f32 %v573, %v574
      %v576 = vand.u32 %v575, 4294901760
      %577 = vmatpush1.msra.mxu0 %v576
      %578 = vmatprep.subr.mxu0 0.0
      %579 = vmatpush1.msra.mxu0 0.0
      %580 = vmatprep.subr.mxu0 0.0
      %581 = vmatpush1.msra.mxu0 0.0
      %582 = vmatprep.subr.mxu0 0.0
      %583 = vmatpush1.msra.mxu0 0.0
      %584 = vmatprep.subr.mxu0 0.0
      %585 = vmatpush1.msra.mxu0 0.0
      %586 = vmatprep.subr.mxu0 0.0
      %587 = vmatpush1.msra.mxu0 0.0
      %588 = vmatprep.subr.mxu0 0.0
      %589 = vmatpush1.msra.mxu0 0.0
      %590 = vmatprep.subr.mxu0 0.0
      %591 = vmatpush1.msra.mxu0 0.0
      %592 = vmatprep.subr.mxu0 0.0
      %593 = vmatpush1.msra.mxu0 0.0
      %594 = vmatprep.subr.mxu0 0.0
      %595 = vmatpush1.msra.mxu0 0.0
      %596 = vmatprep.subr.mxu0 0.0
      %597 = vmatpush1.msra.mxu0 0.0
      %598 = vmatprep.subr.mxu0 0.0
      %599 = vmatpush1.msra.mxu0 0.0
      %600 = vmatprep.subr.mxu0 0.0
      %601 = vmatpush1.msra.mxu0 0.0
      %602 = vmatprep.subr.mxu0 0.0
      %603 = vmatpush1.msra.mxu0 0.0
      %604 = vmatprep.subr.mxu0 0.0
      %605 = vmatpush1.msra.mxu0 0.0
      %606 = vmatprep.subr.mxu0 0.0
      %607 = vmatpush1.msra.mxu0 0.0
      %608 = vmatprep.subr.mxu0 0.0
      %609 = vmatpush1.msra.mxu0 0.0
      %610 = vmatprep.subr.mxu0 0.0
      %611 = vmatpush1.msra.mxu0 0.0
      %612 = vmatprep.subr.mxu0 0.0
      %613 = vmatpush1.msra.mxu0 0.0
      %614 = vmatprep.subr.mxu0 0.0
      %615 = vmatpush1.msra.mxu0 0.0
      %616 = vmatprep.subr.mxu0 0.0
      %617 = vmatpush1.msra.mxu0 0.0
      %618 = vmatprep.subr.mxu0 0.0
      %619 = vmatpush1.msra.mxu0 0.0
      %620 = vmatprep.subr.mxu0 0.0
      %621 = vmatpush1.msra.mxu0 0.0
      %622 = vmatprep.subr.mxu0 0.0
      %623 = vmatpush1.msra.mxu0 0.0
      %624 = vmatprep.subr.mxu0 0.0
      %625 = vmatpush1.msra.mxu0 0.0
      %626 = vmatprep.subr.mxu0 0.0
      %627 = vmatpush1.msra.mxu0 0.0
      %628 = vmatprep.subr.mxu0 0.0
      %629 = vmatpush1.msra.mxu0 0.0
      %630 = vmatprep.subr.mxu0 0.0
      %631 = vmatpush1.msra.mxu0 0.0
      %632 = vmatprep.subr.mxu0 0.0
      %633 = vmatpush1.msra.mxu0 0.0
      %634 = vmatprep.subr.mxu0 0.0
      %635 = vmatpush1.msra.mxu0 0.0
      %636 = vmatprep.subr.mxu0 0.0
      %637 = vmatpush1.msra.mxu0 0.0
      %638 = vmatprep.subr.mxu0 0.0
      %639 = vmatpush1.msra.mxu0 0.0
      %640 = vmatprep.mubr.f32.mxu0 0.0
      %v641 = vand.u32 %v399, 4294901760
      %642 = vmatmul.mubr.f32.gmra.mrb[0].mxu0 %v641
      %v643 = vpop.f32.mrb[0].mxu0
      %v644 = vadd.f32 %v498, %v643
      %v645 = vpop.f32.mrb[0].mxu0
      %646 = vmatprep.mubr.f32.mxu0 0.0
      %v647 = vand.u32 %v402, 4294901760
      %648 = vmatmul.mubr.f32.gmra.mrb[0].mxu0 %v647
      %v649 = vpop.f32.mrb[0].mxu0
      %v650 = vadd.f32 %v508, %v649
      %v651 = vpop.f32.mrb[0].mxu0
      %652 = vmatprep.mubr.f32.mxu0 0.0
      %v653 = vand.u32 %v405, 4294901760
      %654 = vmatmul.mubr.f32.gmra.mrb[0].mxu0 %v653
      %v655 = vpop.f32.mrb[0].mxu0
      %v656 = vadd.f32 %v518, %v655
      %v657 = vpop.f32.mrb[0].mxu0
      %658 = vmatprep.mubr.f32.mxu0 0.0
      %v659 = vand.u32 %v408, 4294901760
      %660 = vmatmul.mubr.f32.gmra.mrb[0].mxu0 %v659
      %v661 = vpop.f32.mrb[0].mxu0
      %v662 = vadd.f32 %v528, %v661
      %v663 = vpop.f32.mrb[0].mxu0
      %664 = vmatprep.mubr.f32.mxu0 0.0
      %v665 = vand.u32 %v411, 4294901760
      %666 = vmatmul.mubr.f32.gmra.mrb[0].mxu0 %v665
      %v667 = vpop.f32.mrb[0].mxu0
      %v668 = vadd.f32 %v538, %v667
      %v669 = vpop.f32.mrb[0].mxu0
      %670 = vmatprep.mubr.f32.mxu0 0.0
      %v671 = vand.u32 %v414, 4294901760
      %672 = vmatmul.mubr.f32.gmra.mrb[0].mxu0 %v671
      %v673 = vpop.f32.mrb[0].mxu0
      %v674 = vadd.f32 %v548, %v673
      %v675 = vpop.f32.mrb[0].mxu0
      %676 = vmatprep.mubr.f32.mxu0 0.0
      %v677 = vand.u32 %v417, 4294901760
      %678 = vmatmul.mubr.f32.gmra.mrb[0].mxu0 %v677
      %v679 = vpop.f32.mrb[0].mxu0
      %v680 = vadd.f32 %v558, %v679
      %v681 = vpop.f32.mrb[0].mxu0
      %682 = vmatprep.mubr.f32.mxu0 0.0
      %v683 = vand.u32 %v420, 4294901760
      %684 = vmatmul.mubr.f32.gmra.mrb[0].mxu0 %v683
      %v685 = vpop.f32.mrb[0].mxu0
      %v686 = vadd.f32 %v568, %v685
      %v687 = vpop.f32.mrb[0].mxu0
      %688 = vdwg.mxu0
      %689 = vmatprep.subr.mxu0 0.0
      %v690 = vand.u32 %v423, 4294901760
      %v691 = vsub.f32 %v423, %v690
      %692 = vmatpush1.msra.mxu0 %v691
      %693 = vmatprep.subr.mxu0 0.0
      %694 = vmatpush1.msra.mxu0 0.0
      %695 = vmatprep.subr.mxu0 0.0
      %696 = vmatpush1.msra.mxu0 0.0
      %697 = vmatprep.subr.mxu0 0.0
      %698 = vmatpush1.msra.mxu0 0.0
      %699 = vmatprep.subr.mxu0 0.0
      %700 = vmatpush1.msra.mxu0 0.0
      %701 = vmatprep.subr.mxu0 0.0
      %702 = vmatpush1.msra.mxu0 0.0
      %703 = vmatprep.subr.mxu0 0.0
      %704 = vmatpush1.msra.mxu0 0.0
      %705 = vmatprep.subr.mxu0 0.0
      %706 = vmatpush1.msra.mxu0 0.0
      %707 = vmatprep.subr.mxu0 0.0
      %708 = vmatpush1.msra.mxu0 0.0
      %709 = vmatprep.subr.mxu0 0.0
      %710 = vmatpush1.msra.mxu0 0.0
      %711 = vmatprep.subr.mxu0 0.0
      %712 = vmatpush1.msra.mxu0 0.0
      %713 = vmatprep.subr.mxu0 0.0
      %714 = vmatpush1.msra.mxu0 0.0
      %715 = vmatprep.subr.mxu0 0.0
      %716 = vmatpush1.msra.mxu0 0.0
      %717 = vmatprep.subr.mxu0 0.0
      %718 = vmatpush1.msra.mxu0 0.0
      %719 = vmatprep.subr.mxu0 0.0
      %720 = vmatpush1.msra.mxu0 0.0
      %721 = vmatprep.subr.mxu0 0.0
      %722 = vmatpush1.msra.mxu0 0.0
      %723 = vmatprep.subr.mxu0 0.0
      %724 = vmatpush1.msra.mxu0 0.0
      %725 = vmatprep.subr.mxu0 0.0
      %726 = vmatpush1.msra.mxu0 0.0
      %727 = vmatprep.subr.mxu0 0.0
      %728 = vmatpush1.msra.mxu0 0.0
      %729 = vmatprep.subr.mxu0 0.0
      %730 = vmatpush1.msra.mxu0 0.0
      %731 = vmatprep.subr.mxu0 0.0
      %732 = vmatpush1.msra.mxu0 0.0
      %733 = vmatprep.subr.mxu0 0.0
      %734 = vmatpush1.msra.mxu0 0.0
      %735 = vmatprep.subr.mxu0 0.0
      %736 = vmatpush1.msra.mxu0 0.0
      %737 = vmatprep.subr.mxu0 0.0
      %738 = vmatpush1.msra.mxu0 0.0
      %739 = vmatprep.subr.mxu0 0.0
      %740 = vmatpush1.msra.mxu0 0.0
      %741 = vmatprep.subr.mxu0 0.0
      %742 = vmatpush1.msra.mxu0 0.0
      %743 = vmatprep.subr.mxu0 0.0
      %744 = vmatpush1.msra.mxu0 0.0
      %745 = vmatprep.subr.mxu0 0.0
      %746 = vmatpush1.msra.mxu0 0.0
      %747 = vmatprep.subr.mxu0 0.0
      %748 = vmatpush1.msra.mxu0 0.0
      %749 = vmatprep.subr.mxu0 0.0
      %750 = vmatpush1.msra.mxu0 0.0
      %751 = vmatprep.subr.mxu0 0.0
      %752 = vmatpush1.msra.mxu0 0.0
      %753 = vmatprep.subr.mxu0 0.0
      %754 = vmatpush1.msra.mxu0 0.0
      %755 = vmatprep.mubr.f32.mxu0 0.0
      %v756 = vand.u32 %v399, 4294901760
      %v757 = vsub.f32 %v399, %v756
      %758 = vmatmul.mubr.f32.gmra.mrb[0].mxu0 %v757
      %v759 = vpop.f32.mrb[0].mxu0
      %v760 = vadd.f32 %v644, %v759
      %v761 = vpop.f32.mrb[0].mxu0
      %762 = vmatprep.mubr.f32.mxu0 0.0
      %v763 = vand.u32 %v402, 4294901760
      %v764 = vsub.f32 %v402, %v763
      %765 = vmatmul.mubr.f32.gmra.mrb[0].mxu0 %v764
      %v766 = vpop.f32.mrb[0].mxu0
      %v767 = vadd.f32 %v650, %v766
      %v768 = vpop.f32.mrb[0].mxu0
      %769 = vmatprep.mubr.f32.mxu0 0.0
      %v770 = vand.u32 %v405, 4294901760
      %v771 = vsub.f32 %v405, %v770
      %772 = vmatmul.mubr.f32.gmra.mrb[0].mxu0 %v771
      %v773 = vpop.f32.mrb[0].mxu0
      %v774 = vadd.f32 %v656, %v773
      %v775 = vpop.f32.mrb[0].mxu0
      %776 = vmatprep.mubr.f32.mxu0 0.0
      %v777 = vand.u32 %v408, 4294901760
      %v778 = vsub.f32 %v408, %v777
      %779 = vmatmul.mubr.f32.gmra.mrb[0].mxu0 %v778
      %v780 = vpop.f32.mrb[0].mxu0
      %v781 = vadd.f32 %v662, %v780
      %v782 = vpop.f32.mrb[0].mxu0
      %783 = vmatprep.mubr.f32.mxu0 0.0
      %v784 = vand.u32 %v411, 4294901760
      %v785 = vsub.f32 %v411, %v784
      %786 = vmatmul.mubr.f32.gmra.mrb[0].mxu0 %v785
      %v787 = vpop.f32.mrb[0].mxu0
      %v788 = vadd.f32 %v668, %v787
      %v789 = vpop.f32.mrb[0].mxu0
      %790 = vmatprep.mubr.f32.mxu0 0.0
      %v791 = vand.u32 %v414, 4294901760
      %v792 = vsub.f32 %v414, %v791
      %793 = vmatmul.mubr.f32.gmra.mrb[0].mxu0 %v792
      %v794 = vpop.f32.mrb[0].mxu0
      %v795 = vadd.f32 %v674, %v794
      %v796 = vpop.f32.mrb[0].mxu0
      %797 = vmatprep.mubr.f32.mxu0 0.0
      %v798 = vand.u32 %v417, 4294901760
      %v799 = vsub.f32 %v417, %v798
      %800 = vmatmul.mubr.f32.gmra.mrb[0].mxu0 %v799
      %v801 = vpop.f32.mrb[0].mxu0
      %v802 = vadd.f32 %v680, %v801
      %v803 = vpop.f32.mrb[0].mxu0
      %804 = vmatprep.mubr.f32.mxu0 0.0
      %v805 = vand.u32 %v420, 4294901760
      %v806 = vsub.f32 %v420, %v805
      %807 = vmatmul.mubr.f32.gmra.mrb[0].mxu0 %v806
      %v808 = vpop.f32.mrb[0].mxu0
      %v809 = vadd.f32 %v686, %v808
      %v810 = vpop.f32.mrb[0].mxu0
      %811 = vdwg.mxu0
      %812 = vmatprep.subr.mxu0 0.0
      %v813 = vand.u32 %v423, 4294901760
      %814 = vmatpush1.msra.mxu0 %v813
      %815 = vmatprep.subr.mxu0 0.0
      %816 = vmatpush1.msra.mxu0 0.0
      %817 = vmatprep.subr.mxu0 0.0
      %818 = vmatpush1.msra.mxu0 0.0
      %819 = vmatprep.subr.mxu0 0.0
      %820 = vmatpush1.msra.mxu0 0.0
      %821 = vmatprep.subr.mxu0 0.0
      %822 = vmatpush1.msra.mxu0 0.0
      %823 = vmatprep.subr.mxu0 0.0
      %824 = vmatpush1.msra.mxu0 0.0
      %825 = vmatprep.subr.mxu0 0.0
      %826 = vmatpush1.msra.mxu0 0.0
      %827 = vmatprep.subr.mxu0 0.0
      %828 = vmatpush1.msra.mxu0 0.0
      %829 = vmatprep.subr.mxu0 0.0
      %830 = vmatpush1.msra.mxu0 0.0
      %831 = vmatprep.subr.mxu0 0.0
      %832 = vmatpush1.msra.mxu0 0.0
      %833 = vmatprep.subr.mxu0 0.0
      %834 = vmatpush1.msra.mxu0 0.0
      %835 = vmatprep.subr.mxu0 0.0
      %836 = vmatpush1.msra.mxu0 0.0
      %837 = vmatprep.subr.mxu0 0.0
      %838 = vmatpush1.msra.mxu0 0.0
      %839 = vmatprep.subr.mxu0 0.0
      %840 = vmatpush1.msra.mxu0 0.0
      %841 = vmatprep.subr.mxu0 0.0
      %842 = vmatpush1.msra.mxu0 0.0
      %843 = vmatprep.subr.mxu0 0.0
      %844 = vmatpush1.msra.mxu0 0.0
      %845 = vmatprep.subr.mxu0 0.0
      %846 = vmatpush1.msra.mxu0 0.0
      %847 = vmatprep.subr.mxu0 0.0
      %848 = vmatpush1.msra.mxu0 0.0
      %849 = vmatprep.subr.mxu0 0.0
      %850 = vmatpush1.msra.mxu0 0.0
      %851 = vmatprep.subr.mxu0 0.0
      %852 = vmatpush1.msra.mxu0 0.0
      %853 = vmatprep.subr.mxu0 0.0
      %854 = vmatpush1.msra.mxu0 0.0
      %855 = vmatprep.subr.mxu0 0.0
      %856 = vmatpush1.msra.mxu0 0.0
      %857 = vmatprep.subr.mxu0 0.0
      %858 = vmatpush1.msra.mxu0 0.0
      %859 = vmatprep.subr.mxu0 0.0
      %860 = vmatpush1.msra.mxu0 0.0
      %861 = vmatprep.subr.mxu0 0.0
      %862 = vmatpush1.msra.mxu0 0.0
      %863 = vmatprep.subr.mxu0 0.0
      %864 = vmatpush1.msra.mxu0 0.0
      %865 = vmatprep.subr.mxu0 0.0
      %866 = vmatpush1.msra.mxu0 0.0
      %867 = vmatprep.subr.mxu0 0.0
      %868 = vmatpush1.msra.mxu0 0.0
      %869 = vmatprep.subr.mxu0 0.0
      %870 = vmatpush1.msra.mxu0 0.0
      %871 = vmatprep.subr.mxu0 0.0
      %872 = vmatpush1.msra.mxu0 0.0
      %873 = vmatprep.subr.mxu0 0.0
      %874 = vmatpush1.msra.mxu0 0.0
      %875 = vmatprep.subr.mxu0 0.0
      %876 = vmatpush1.msra.mxu0 0.0
      %877 = vmatprep.mubr.f32.mxu0 0.0
      %v878 = vand.u32 %v399, 4294901760
      %v879 = vsub.f32 %v399, %v878
      %v880 = vand.u32 %v879, 4294901760
      %881 = vmatmul.mubr.f32.gmra.mrb[0].mxu0 %v880
      %v882 = vpop.f32.mrb[0].mxu0
      %v883 = vadd.f32 %v760, %v882
      %v884 = vpop.f32.mrb[0].mxu0
      %885 = vmatprep.mubr.f32.mxu0 0.0
      %v886 = vand.u32 %v402, 4294901760
      %v887 = vsub.f32 %v402, %v886
      %v888 = vand.u32 %v887, 4294901760
      %889 = vmatmul.mubr.f32.gmra.mrb[0].mxu0 %v888
      %v890 = vpop.f32.mrb[0].mxu0
      %v891 = vadd.f32 %v767, %v890
      %v892 = vpop.f32.mrb[0].mxu0
      %893 = vmatprep.mubr.f32.mxu0 0.0
      %v894 = vand.u32 %v405, 4294901760
      %v895 = vsub.f32 %v405, %v894
      %v896 = vand.u32 %v895, 4294901760
      %897 = vmatmul.mubr.f32.gmra.mrb[0].mxu0 %v896
      %v898 = vpop.f32.mrb[0].mxu0
      %v899 = vadd.f32 %v774, %v898
      %v900 = vpop.f32.mrb[0].mxu0
      %901 = vmatprep.mubr.f32.mxu0 0.0
      %v902 = vand.u32 %v408, 4294901760
      %v903 = vsub.f32 %v408, %v902
      %v904 = vand.u32 %v903, 4294901760
      %905 = vmatmul.mubr.f32.gmra.mrb[0].mxu0 %v904
      %v906 = vpop.f32.mrb[0].mxu0
      %v907 = vadd.f32 %v781, %v906
      %v908 = vpop.f32.mrb[0].mxu0
      %909 = vmatprep.mubr.f32.mxu0 0.0
      %v910 = vand.u32 %v411, 4294901760
      %v911 = vsub.f32 %v411, %v910
      %v912 = vand.u32 %v911, 4294901760
      %913 = vmatmul.mubr.f32.gmra.mrb[0].mxu0 %v912
      %v914 = vpop.f32.mrb[0].mxu0
      %v915 = vadd.f32 %v788, %v914
      %v916 = vpop.f32.mrb[0].mxu0
      %917 = vmatprep.mubr.f32.mxu0 0.0
      %v918 = vand.u32 %v414, 4294901760
      %v919 = vsub.f32 %v414, %v918
      %v920 = vand.u32 %v919, 4294901760
      %921 = vmatmul.mubr.f32.gmra.mrb[0].mxu0 %v920
      %v922 = vpop.f32.mrb[0].mxu0
      %v923 = vadd.f32 %v795, %v922
      %v924 = vpop.f32.mrb[0].mxu0
      %925 = vmatprep.mubr.f32.mxu0 0.0
      %v926 = vand.u32 %v417, 4294901760
      %v927 = vsub.f32 %v417, %v926
      %v928 = vand.u32 %v927, 4294901760
      %929 = vmatmul.mubr.f32.gmra.mrb[0].mxu0 %v928
      %v930 = vpop.f32.mrb[0].mxu0
      %v931 = vadd.f32 %v802, %v930
      %v932 = vpop.f32.mrb[0].mxu0
      %933 = vmatprep.mubr.f32.mxu0 0.0
      %v934 = vand.u32 %v420, 4294901760
      %v935 = vsub.f32 %v420, %v934
      %v936 = vand.u32 %v935, 4294901760
      %937 = vmatmul.mubr.f32.gmra.mrb[0].mxu0 %v936
      %v938 = vpop.f32.mrb[0].mxu0
      %v939 = vadd.f32 %v809, %v938
      %v940 = vpop.f32.mrb[0].mxu0
      %941 = vdwg.mxu0
      %942 = vmatprep.subr.mxu0 0.0
      %v943 = vand.u32 %v423, 4294901760
      %v944 = vsub.f32 %v423, %v943
      %v945 = vand.u32 %v944, 4294901760
      %946 = vmatpush1.msra.mxu0 %v945
      %947 = vmatprep.subr.mxu0 0.0
      %948 = vmatpush1.msra.mxu0 0.0
      %949 = vmatprep.subr.mxu0 0.0
      %950 = vmatpush1.msra.mxu0 0.0
      %951 = vmatprep.subr.mxu0 0.0
      %952 = vmatpush1.msra.mxu0 0.0
      %953 = vmatprep.subr.mxu0 0.0
      %954 = vmatpush1.msra.mxu0 0.0
      %955 = vmatprep.subr.mxu0 0.0
      %956 = vmatpush1.msra.mxu0 0.0
      %957 = vmatprep.subr.mxu0 0.0
      %958 = vmatpush1.msra.mxu0 0.0
      %959 = vmatprep.subr.mxu0 0.0
      %960 = vmatpush1.msra.mxu0 0.0
      %961 = vmatprep.subr.mxu0 0.0
      %962 = vmatpush1.msra.mxu0 0.0
      %963 = vmatprep.subr.mxu0 0.0
      %964 = vmatpush1.msra.mxu0 0.0
      %965 = vmatprep.subr.mxu0 0.0
      %966 = vmatpush1.msra.mxu0 0.0
      %967 = vmatprep.subr.mxu0 0.0
      %968 = vmatpush1.msra.mxu0 0.0
      %969 = vmatprep.subr.mxu0 0.0
      %970 = vmatpush1.msra.mxu0 0.0
      %971 = vmatprep.subr.mxu0 0.0
      %972 = vmatpush1.msra.mxu0 0.0
      %973 = vmatprep.subr.mxu0 0.0
      %974 = vmatpush1.msra.mxu0 0.0
      %975 = vmatprep.subr.mxu0 0.0
      %976 = vmatpush1.msra.mxu0 0.0
      %977 = vmatprep.subr.mxu0 0.0
      %978 = vmatpush1.msra.mxu0 0.0
      %979 = vmatprep.subr.mxu0 0.0
      %980 = vmatpush1.msra.mxu0 0.0
      %981 = vmatprep.subr.mxu0 0.0
      %982 = vmatpush1.msra.mxu0 0.0
      %983 = vmatprep.subr.mxu0 0.0
      %984 = vmatpush1.msra.mxu0 0.0
      %985 = vmatprep.subr.mxu0 0.0
      %986 = vmatpush1.msra.mxu0 0.0
      %987 = vmatprep.subr.mxu0 0.0
      %988 = vmatpush1.msra.mxu0 0.0
      %989 = vmatprep.subr.mxu0 0.0
      %990 = vmatpush1.msra.mxu0 0.0
      %991 = vmatprep.subr.mxu0 0.0
      %992 = vmatpush1.msra.mxu0 0.0
      %993 = vmatprep.subr.mxu0 0.0
      %994 = vmatpush1.msra.mxu0 0.0
      %995 = vmatprep.subr.mxu0 0.0
      %996 = vmatpush1.msra.mxu0 0.0
      %997 = vmatprep.subr.mxu0 0.0
      %998 = vmatpush1.msra.mxu0 0.0
      %999 = vmatprep.subr.mxu0 0.0
      %1000 = vmatpush1.msra.mxu0 0.0
      %1001 = vmatprep.subr.mxu0 0.0
      %1002 = vmatpush1.msra.mxu0 0.0
      %1003 = vmatprep.subr.mxu0 0.0
      %1004 = vmatpush1.msra.mxu0 0.0
      %1005 = vmatprep.subr.mxu0 0.0
      %1006 = vmatpush1.msra.mxu0 0.0
      %1007 = vmatprep.subr.mxu0 0.0
      %1008 = vmatpush1.msra.mxu0 0.0
      %1009 = vmatprep.mubr.f32.mxu0 0.0
      %v1010 = vand.u32 %v399, 4294901760
      %1011 = vmatmul.mubr.f32.gmra.mrb[0].mxu0 %v1010
      %v1012 = vpop.f32.mrb[0].mxu0
      %v1013 = vadd.f32 %v883, %v1012
      %v1014 = vpop.f32.mrb[0].mxu0
      %1015 = vmatprep.mubr.f32.mxu0 0.0
      %v1016 = vand.u32 %v402, 4294901760
      %1017 = vmatmul.mubr.f32.gmra.mrb[0].mxu0 %v1016
      %v1018 = vpop.f32.mrb[0].mxu0
      %v1019 = vadd.f32 %v891, %v1018
      %v1020 = vpop.f32.mrb[0].mxu0
      %1021 = vmatprep.mubr.f32.mxu0 0.0
      %v1022 = vand.u32 %v405, 4294901760
      %1023 = vmatmul.mubr.f32.gmra.mrb[0].mxu0 %v1022
      %v1024 = vpop.f32.mrb[0].mxu0
      %v1025 = vadd.f32 %v899, %v1024
      %v1026 = vpop.f32.mrb[0].mxu0
      %1027 = vmatprep.mubr.f32.mxu0 0.0
      %v1028 = vand.u32 %v408, 4294901760
      %1029 = vmatmul.mubr.f32.gmra.mrb[0].mxu0 %v1028
      %v1030 = vpop.f32.mrb[0].mxu0
      %v1031 = vadd.f32 %v907, %v1030
      %v1032 = vpop.f32.mrb[0].mxu0
      %1033 = vmatprep.mubr.f32.mxu0 0.0
      %v1034 = vand.u32 %v411, 4294901760
      %1035 = vmatmul.mubr.f32.gmra.mrb[0].mxu0 %v1034
      %v1036 = vpop.f32.mrb[0].mxu0
      %v1037 = vadd.f32 %v915, %v1036
      %v1038 = vpop.f32.mrb[0].mxu0
      %1039 = vmatprep.mubr.f32.mxu0 0.0
      %v1040 = vand.u32 %v414, 4294901760
      %1041 = vmatmul.mubr.f32.gmra.mrb[0].mxu0 %v1040
      %v1042 = vpop.f32.mrb[0].mxu0
      %v1043 = vadd.f32 %v923, %v1042
      %v1044 = vpop.f32.mrb[0].mxu0
      %1045 = vmatprep.mubr.f32.mxu0 0.0
      %v1046 = vand.u32 %v417, 4294901760
      %1047 = vmatmul.mubr.f32.gmra.mrb[0].mxu0 %v1046
      %v1048 = vpop.f32.mrb[0].mxu0
      %v1049 = vadd.f32 %v931, %v1048
      %v1050 = vpop.f32.mrb[0].mxu0
      %1051 = vmatprep.mubr.f32.mxu0 0.0
      %v1052 = vand.u32 %v420, 4294901760
      %1053 = vmatmul.mubr.f32.gmra.mrb[0].mxu0 %v1052
      %v1054 = vpop.f32.mrb[0].mxu0
      %v1055 = vadd.f32 %v939, %v1054
      %v1056 = vpop.f32.mrb[0].mxu0
      %1057 = vdwg.mxu0
      %1058 = vmatprep.subr.mxu0 0.0
      %v1059 = vand.u32 %v423, 4294901760
      %1060 = vmatpush1.msra.mxu0 %v1059
      %1061 = vmatprep.subr.mxu0 0.0
      %1062 = vmatpush1.msra.mxu0 0.0
      %1063 = vmatprep.subr.mxu0 0.0
      %1064 = vmatpush1.msra.mxu0 0.0
      %1065 = vmatprep.subr.mxu0 0.0
      %1066 = vmatpush1.msra.mxu0 0.0
      %1067 = vmatprep.subr.mxu0 0.0
      %1068 = vmatpush1.msra.mxu0 0.0
      %1069 = vmatprep.subr.mxu0 0.0
      %1070 = vmatpush1.msra.mxu0 0.0
      %1071 = vmatprep.subr.mxu0 0.0
      %1072 = vmatpush1.msra.mxu0 0.0
      %1073 = vmatprep.subr.mxu0 0.0
      %1074 = vmatpush1.msra.mxu0 0.0
      %1075 = vmatprep.subr.mxu0 0.0
      %1076 = vmatpush1.msra.mxu0 0.0
      %1077 = vmatprep.subr.mxu0 0.0
      %1078 = vmatpush1.msra.mxu0 0.0
      %1079 = vmatprep.subr.mxu0 0.0
      %1080 = vmatpush1.msra.mxu0 0.0
      %1081 = vmatprep.subr.mxu0 0.0
      %1082 = vmatpush1.msra.mxu0 0.0
      %1083 = vmatprep.subr.mxu0 0.0
      %1084 = vmatpush1.msra.mxu0 0.0
      %1085 = vmatprep.subr.mxu0 0.0
      %1086 = vmatpush1.msra.mxu0 0.0
      %1087 = vmatprep.subr.mxu0 0.0
      %1088 = vmatpush1.msra.mxu0 0.0
      %1089 = vmatprep.subr.mxu0 0.0
      %1090 = vmatpush1.msra.mxu0 0.0
      %1091 = vmatprep.subr.mxu0 0.0
      %1092 = vmatpush1.msra.mxu0 0.0
      %1093 = vmatprep.subr.mxu0 0.0
      %1094 = vmatpush1.msra.mxu0 0.0
      %1095 = vmatprep.subr.mxu0 0.0
      %1096 = vmatpush1.msra.mxu0 0.0
      %1097 = vmatprep.subr.mxu0 0.0
      %1098 = vmatpush1.msra.mxu0 0.0
      %1099 = vmatprep.subr.mxu0 0.0
      %1100 = vmatpush1.msra.mxu0 0.0
      %1101 = vmatprep.subr.mxu0 0.0
      %1102 = vmatpush1.msra.mxu0 0.0
      %1103 = vmatprep.subr.mxu0 0.0
      %1104 = vmatpush1.msra.mxu0 0.0
      %1105 = vmatprep.subr.mxu0 0.0
      %1106 = vmatpush1.msra.mxu0 0.0
      %1107 = vmatprep.subr.mxu0 0.0
      %1108 = vmatpush1.msra.mxu0 0.0
      %1109 = vmatprep.subr.mxu0 0.0
      %1110 = vmatpush1.msra.mxu0 0.0
      %1111 = vmatprep.subr.mxu0 0.0
      %1112 = vmatpush1.msra.mxu0 0.0
      %1113 = vmatprep.subr.mxu0 0.0
      %1114 = vmatpush1.msra.mxu0 0.0
      %1115 = vmatprep.subr.mxu0 0.0
      %1116 = vmatpush1.msra.mxu0 0.0
      %1117 = vmatprep.subr.mxu0 0.0
      %1118 = vmatpush1.msra.mxu0 0.0
      %1119 = vmatprep.subr.mxu0 0.0
      %1120 = vmatpush1.msra.mxu0 0.0
      %1121 = vmatprep.subr.mxu0 0.0
      %1122 = vmatpush1.msra.mxu0 0.0
      %1123 = vmatprep.mubr.f32.mxu0 0.0
      %v1124 = vand.u32 %v399, 4294901760
      %1125 = vmatmul.mubr.f32.gmra.mrb[0].mxu0 %v1124
      %v1126 = vpop.f32.mrb[0].mxu0
      %v1127 = vadd.f32 %v1013, %v1126
      %v1128 = vpop.f32.mrb[0].mxu0
      %1129 = vmatprep.mubr.f32.mxu0 0.0
      %v1130 = vand.u32 %v402, 4294901760
      %1131 = vmatmul.mubr.f32.gmra.mrb[0].mxu0 %v1130
      %v1132 = vpop.f32.mrb[0].mxu0
      %v1133 = vadd.f32 %v1019, %v1132
      %v1134 = vpop.f32.mrb[0].mxu0
      %1135 = vmatprep.mubr.f32.mxu0 0.0
      %v1136 = vand.u32 %v405, 4294901760
      %1137 = vmatmul.mubr.f32.gmra.mrb[0].mxu0 %v1136
      %v1138 = vpop.f32.mrb[0].mxu0
      %v1139 = vadd.f32 %v1025, %v1138
      %v1140 = vpop.f32.mrb[0].mxu0
      %1141 = vmatprep.mubr.f32.mxu0 0.0
      %v1142 = vand.u32 %v408, 4294901760
      %1143 = vmatmul.mubr.f32.gmra.mrb[0].mxu0 %v1142
      %v1144 = vpop.f32.mrb[0].mxu0
      %v1145 = vadd.f32 %v1031, %v1144
      %v1146 = vpop.f32.mrb[0].mxu0
      %1147 = vmatprep.mubr.f32.mxu0 0.0
      %v1148 = vand.u32 %v411, 4294901760
      %1149 = vmatmul.mubr.f32.gmra.mrb[0].mxu0 %v1148
      %v1150 = vpop.f32.mrb[0].mxu0
      %v1151 = vadd.f32 %v1037, %v1150
      %v1152 = vpop.f32.mrb[0].mxu0
      %1153 = vmatprep.mubr.f32.mxu0 0.0
      %v1154 = vand.u32 %v414, 4294901760
      %1155 = vmatmul.mubr.f32.gmra.mrb[0].mxu0 %v1154
      %v1156 = vpop.f32.mrb[0].mxu0
      %v1157 = vadd.f32 %v1043, %v1156
      %v1158 = vpop.f32.mrb[0].mxu0
      %1159 = vmatprep.mubr.f32.mxu0 0.0
      %v1160 = vand.u32 %v417, 4294901760
      %1161 = vmatmul.mubr.f32.gmra.mrb[0].mxu0 %v1160
      %v1162 = vpop.f32.mrb[0].mxu0
      %v1163 = vadd.f32 %v1049, %v1162
      %v1164 = vpop.f32.mrb[0].mxu0
      %1165 = vmatprep.mubr.f32.mxu0 0.0
      %v1166 = vand.u32 %v420, 4294901760
      %1167 = vmatmul.mubr.f32.gmra.mrb[0].mxu0 %v1166
      %v1168 = vpop.f32.mrb[0].mxu0
      %v1169 = vadd.f32 %v1055, %v1168
      %v1170 = vpop.f32.mrb[0].mxu0
      %1171 = vdwg.mxu0
      %v1173 = vsel %vm397, %v335, 0
      %v1176 = vsel %vm397, %v336, 0
      %v1179 = vsel %vm397, %v337, 0
      %v1182 = vsel %vm397, %v338, 0
      %v1185 = vsel %vm397, %v339, 0
      %v1188 = vsel %vm397, %v340, 0
      %v1191 = vsel %vm397, %v341, 0
      %v1194 = vsel %vm397, %v342, 0
      %v1196 = vsel %vm422, %v393, 0
      %1198 = vmatprep.subr.mxu0 0.0
      %v1199 = vand.u32 %v1196, 4294901760
      %1200 = vmatpush1.msra.mxu0 %v1199
      %1201 = vmatprep.subr.mxu0 0.0
      %1202 = vmatpush1.msra.mxu0 0.0
      %1203 = vmatprep.subr.mxu0 0.0
      %1204 = vmatpush1.msra.mxu0 0.0
      %1205 = vmatprep.subr.mxu0 0.0
      %1206 = vmatpush1.msra.mxu0 0.0
      %1207 = vmatprep.subr.mxu0 0.0
      %1208 = vmatpush1.msra.mxu0 0.0
      %1209 = vmatprep.subr.mxu0 0.0
      %1210 = vmatpush1.msra.mxu0 0.0
      %1211 = vmatprep.subr.mxu0 0.0
      %1212 = vmatpush1.msra.mxu0 0.0
      %1213 = vmatprep.subr.mxu0 0.0
      %1214 = vmatpush1.msra.mxu0 0.0
      %1215 = vmatprep.subr.mxu0 0.0
      %1216 = vmatpush1.msra.mxu0 0.0
      %1217 = vmatprep.subr.mxu0 0.0
      %1218 = vmatpush1.msra.mxu0 0.0
      %1219 = vmatprep.subr.mxu0 0.0
      %1220 = vmatpush1.msra.mxu0 0.0
      %1221 = vmatprep.subr.mxu0 0.0
      %1222 = vmatpush1.msra.mxu0 0.0
      %1223 = vmatprep.subr.mxu0 0.0
      %1224 = vmatpush1.msra.mxu0 0.0
      %1225 = vmatprep.subr.mxu0 0.0
      %1226 = vmatpush1.msra.mxu0 0.0
      %1227 = vmatprep.subr.mxu0 0.0
      %1228 = vmatpush1.msra.mxu0 0.0
      %1229 = vmatprep.subr.mxu0 0.0
      %1230 = vmatpush1.msra.mxu0 0.0
      %1231 = vmatprep.subr.mxu0 0.0
      %1232 = vmatpush1.msra.mxu0 0.0
      %1233 = vmatprep.subr.mxu0 0.0
      %1234 = vmatpush1.msra.mxu0 0.0
      %1235 = vmatprep.subr.mxu0 0.0
      %1236 = vmatpush1.msra.mxu0 0.0
      %1237 = vmatprep.subr.mxu0 0.0
      %1238 = vmatpush1.msra.mxu0 0.0
      %1239 = vmatprep.subr.mxu0 0.0
      %1240 = vmatpush1.msra.mxu0 0.0
      %1241 = vmatprep.subr.mxu0 0.0
      %1242 = vmatpush1.msra.mxu0 0.0
      %1243 = vmatprep.subr.mxu0 0.0
      %1244 = vmatpush1.msra.mxu0 0.0
      %1245 = vmatprep.subr.mxu0 0.0
      %1246 = vmatpush1.msra.mxu0 0.0
      %1247 = vmatprep.subr.mxu0 0.0
      %1248 = vmatpush1.msra.mxu0 0.0
      %1249 = vmatprep.subr.mxu0 0.0
      %1250 = vmatpush1.msra.mxu0 0.0
      %1251 = vmatprep.subr.mxu0 0.0
      %1252 = vmatpush1.msra.mxu0 0.0
      %1253 = vmatprep.subr.mxu0 0.0
      %1254 = vmatpush1.msra.mxu0 0.0
      %1255 = vmatprep.subr.mxu0 0.0
      %1256 = vmatpush1.msra.mxu0 0.0
      %1257 = vmatprep.subr.mxu0 0.0
      %1258 = vmatpush1.msra.mxu0 0.0
      %1259 = vmatprep.subr.mxu0 0.0
      %1260 = vmatpush1.msra.mxu0 0.0
      %1261 = vmatprep.subr.mxu0 0.0
      %1262 = vmatpush1.msra.mxu0 0.0
      %1263 = vmatprep.mubr.f32.mxu0 0.0
      %v1264 = vand.u32 %v1173, 4294901760
      %v1265 = vsub.f32 %v1173, %v1264
      %v1266 = vand.u32 %v1265, 4294901760
      %v1267 = vsub.f32 %v1265, %v1266
      %v1268 = vand.u32 %v1267, 4294901760
      %1269 = vmatmul.mubr.f32.gmra.mrb[0].mxu0 %v1268
      %v1270 = vpop.f32.mrb[0].mxu0
      %v1271 = vadd.f32 %v1127, %v1270
      %v1272 = vpop.f32.mrb[0].mxu0
      %1273 = vmatprep.mubr.f32.mxu0 0.0
      %v1274 = vand.u32 %v1176, 4294901760
      %v1275 = vsub.f32 %v1176, %v1274
      %v1276 = vand.u32 %v1275, 4294901760
      %v1277 = vsub.f32 %v1275, %v1276
      %v1278 = vand.u32 %v1277, 4294901760
      %1279 = vmatmul.mubr.f32.gmra.mrb[0].mxu0 %v1278
      %v1280 = vpop.f32.mrb[0].mxu0
      %v1281 = vadd.f32 %v1133, %v1280
      %v1282 = vpop.f32.mrb[0].mxu0
      %1283 = vmatprep.mubr.f32.mxu0 0.0
      %v1284 = vand.u32 %v1179, 4294901760
      %v1285 = vsub.f32 %v1179, %v1284
      %v1286 = vand.u32 %v1285, 4294901760
      %v1287 = vsub.f32 %v1285, %v1286
      %v1288 = vand.u32 %v1287, 4294901760
      %1289 = vmatmul.mubr.f32.gmra.mrb[0].mxu0 %v1288
      %v1290 = vpop.f32.mrb[0].mxu0
      %v1291 = vadd.f32 %v1139, %v1290
      %v1292 = vpop.f32.mrb[0].mxu0
      %1293 = vmatprep.mubr.f32.mxu0 0.0
      %v1294 = vand.u32 %v1182, 4294901760
      %v1295 = vsub.f32 %v1182, %v1294
      %v1296 = vand.u32 %v1295, 4294901760
      %v1297 = vsub.f32 %v1295, %v1296
      %v1298 = vand.u32 %v1297, 4294901760
      %1299 = vmatmul.mubr.f32.gmra.mrb[0].mxu0 %v1298
      %v1300 = vpop.f32.mrb[0].mxu0
      %v1301 = vadd.f32 %v1145, %v1300
      %v1302 = vpop.f32.mrb[0].mxu0
      %1303 = vmatprep.mubr.f32.mxu0 0.0
      %v1304 = vand.u32 %v1185, 4294901760
      %v1305 = vsub.f32 %v1185, %v1304
      %v1306 = vand.u32 %v1305, 4294901760
      %v1307 = vsub.f32 %v1305, %v1306
      %v1308 = vand.u32 %v1307, 4294901760
      %1309 = vmatmul.mubr.f32.gmra.mrb[0].mxu0 %v1308
      %v1310 = vpop.f32.mrb[0].mxu0
      %v1311 = vadd.f32 %v1151, %v1310
      %v1312 = vpop.f32.mrb[0].mxu0
      %1313 = vmatprep.mubr.f32.mxu0 0.0
      %v1314 = vand.u32 %v1188, 4294901760
      %v1315 = vsub.f32 %v1188, %v1314
      %v1316 = vand.u32 %v1315, 4294901760
      %v1317 = vsub.f32 %v1315, %v1316
      %v1318 = vand.u32 %v1317, 4294901760
      %1319 = vmatmul.mubr.f32.gmra.mrb[0].mxu0 %v1318
      %v1320 = vpop.f32.mrb[0].mxu0
      %v1321 = vadd.f32 %v1157, %v1320
      %v1322 = vpop.f32.mrb[0].mxu0
      %1323 = vmatprep.mubr.f32.mxu0 0.0
      %v1324 = vand.u32 %v1191, 4294901760
      %v1325 = vsub.f32 %v1191, %v1324
      %v1326 = vand.u32 %v1325, 4294901760
      %v1327 = vsub.f32 %v1325, %v1326
      %v1328 = vand.u32 %v1327, 4294901760
      %1329 = vmatmul.mubr.f32.gmra.mrb[0].mxu0 %v1328
      %v1330 = vpop.f32.mrb[0].mxu0
      %v1331 = vadd.f32 %v1163, %v1330
      %v1332 = vpop.f32.mrb[0].mxu0
      %1333 = vmatprep.mubr.f32.mxu0 0.0
      %v1334 = vand.u32 %v1194, 4294901760
      %v1335 = vsub.f32 %v1194, %v1334
      %v1336 = vand.u32 %v1335, 4294901760
      %v1337 = vsub.f32 %v1335, %v1336
      %v1338 = vand.u32 %v1337, 4294901760
      %1339 = vmatmul.mubr.f32.gmra.mrb[0].mxu0 %v1338
      %v1340 = vpop.f32.mrb[0].mxu0
      %v1341 = vadd.f32 %v1169, %v1340
      %v1342 = vpop.f32.mrb[0].mxu0
      %1343 = vdwg.mxu0
      %1344 = vmatprep.subr.mxu0 0.0
      %v1345 = vand.u32 %v1196, 4294901760
      %v1346 = vsub.f32 %v1196, %v1345
      %v1347 = vand.u32 %v1346, 4294901760
      %v1348 = vsub.f32 %v1346, %v1347
      %v1349 = vand.u32 %v1348, 4294901760
      %1350 = vmatpush1.msra.mxu0 %v1349
      %1351 = vmatprep.subr.mxu0 0.0
      %1352 = vmatpush1.msra.mxu0 0.0
      %1353 = vmatprep.subr.mxu0 0.0
      %1354 = vmatpush1.msra.mxu0 0.0
      %1355 = vmatprep.subr.mxu0 0.0
      %1356 = vmatpush1.msra.mxu0 0.0
      %1357 = vmatprep.subr.mxu0 0.0
      %1358 = vmatpush1.msra.mxu0 0.0
      %1359 = vmatprep.subr.mxu0 0.0
      %1360 = vmatpush1.msra.mxu0 0.0
      %1361 = vmatprep.subr.mxu0 0.0
      %1362 = vmatpush1.msra.mxu0 0.0
      %1363 = vmatprep.subr.mxu0 0.0
      %1364 = vmatpush1.msra.mxu0 0.0
      %1365 = vmatprep.subr.mxu0 0.0
      %1366 = vmatpush1.msra.mxu0 0.0
      %1367 = vmatprep.subr.mxu0 0.0
      %1368 = vmatpush1.msra.mxu0 0.0
      %1369 = vmatprep.subr.mxu0 0.0
      %1370 = vmatpush1.msra.mxu0 0.0
      %1371 = vmatprep.subr.mxu0 0.0
      %1372 = vmatpush1.msra.mxu0 0.0
      %1373 = vmatprep.subr.mxu0 0.0
      %1374 = vmatpush1.msra.mxu0 0.0
      %1375 = vmatprep.subr.mxu0 0.0
      %1376 = vmatpush1.msra.mxu0 0.0
      %1377 = vmatprep.subr.mxu0 0.0
      %1378 = vmatpush1.msra.mxu0 0.0
      %1379 = vmatprep.subr.mxu0 0.0
      %1380 = vmatpush1.msra.mxu0 0.0
      %1381 = vmatprep.subr.mxu0 0.0
      %1382 = vmatpush1.msra.mxu0 0.0
      %1383 = vmatprep.subr.mxu0 0.0
      %1384 = vmatpush1.msra.mxu0 0.0
      %1385 = vmatprep.subr.mxu0 0.0
      %1386 = vmatpush1.msra.mxu0 0.0
      %1387 = vmatprep.subr.mxu0 0.0
      %1388 = vmatpush1.msra.mxu0 0.0
      %1389 = vmatprep.subr.mxu0 0.0
      %1390 = vmatpush1.msra.mxu0 0.0
      %1391 = vmatprep.subr.mxu0 0.0
      %1392 = vmatpush1.msra.mxu0 0.0
      %1393 = vmatprep.subr.mxu0 0.0
      %1394 = vmatpush1.msra.mxu0 0.0
      %1395 = vmatprep.subr.mxu0 0.0
      %1396 = vmatpush1.msra.mxu0 0.0
      %1397 = vmatprep.subr.mxu0 0.0
      %1398 = vmatpush1.msra.mxu0 0.0
      %1399 = vmatprep.subr.mxu0 0.0
      %1400 = vmatpush1.msra.mxu0 0.0
      %1401 = vmatprep.subr.mxu0 0.0
      %1402 = vmatpush1.msra.mxu0 0.0
      %1403 = vmatprep.subr.mxu0 0.0
      %1404 = vmatpush1.msra.mxu0 0.0
      %1405 = vmatprep.subr.mxu0 0.0
      %1406 = vmatpush1.msra.mxu0 0.0
      %1407 = vmatprep.subr.mxu0 0.0
      %1408 = vmatpush1.msra.mxu0 0.0
      %1409 = vmatprep.subr.mxu0 0.0
      %1410 = vmatpush1.msra.mxu0 0.0
      %1411 = vmatprep.subr.mxu0 0.0
      %1412 = vmatpush1.msra.mxu0 0.0
      %1413 = vmatprep.mubr.f32.mxu0 0.0
      %v1414 = vand.u32 %v1173, 4294901760
      %1415 = vmatmul.mubr.f32.gmra.mrb[0].mxu0 %v1414
      %v1416 = vpop.f32.mrb[0].mxu0
      %v1417 = vadd.f32 %v1271, %v1416
      %v1418 = vpop.f32.mrb[0].mxu0
      %1419 = vmatprep.mubr.f32.mxu0 0.0
      %v1420 = vand.u32 %v1176, 4294901760
      %1421 = vmatmul.mubr.f32.gmra.mrb[0].mxu0 %v1420
      %v1422 = vpop.f32.mrb[0].mxu0
      %v1423 = vadd.f32 %v1281, %v1422
      %v1424 = vpop.f32.mrb[0].mxu0
      %1425 = vmatprep.mubr.f32.mxu0 0.0
      %v1426 = vand.u32 %v1179, 4294901760
      %1427 = vmatmul.mubr.f32.gmra.mrb[0].mxu0 %v1426
      %v1428 = vpop.f32.mrb[0].mxu0
      %v1429 = vadd.f32 %v1291, %v1428
      %v1430 = vpop.f32.mrb[0].mxu0
      %1431 = vmatprep.mubr.f32.mxu0 0.0
      %v1432 = vand.u32 %v1182, 4294901760
      %1433 = vmatmul.mubr.f32.gmra.mrb[0].mxu0 %v1432
      %v1434 = vpop.f32.mrb[0].mxu0
      %v1435 = vadd.f32 %v1301, %v1434
      %v1436 = vpop.f32.mrb[0].mxu0
      %1437 = vmatprep.mubr.f32.mxu0 0.0
      %v1438 = vand.u32 %v1185, 4294901760
      %1439 = vmatmul.mubr.f32.gmra.mrb[0].mxu0 %v1438
      %v1440 = vpop.f32.mrb[0].mxu0
      %v1441 = vadd.f32 %v1311, %v1440
      %v1442 = vpop.f32.mrb[0].mxu0
      %1443 = vmatprep.mubr.f32.mxu0 0.0
      %v1444 = vand.u32 %v1188, 4294901760
      %1445 = vmatmul.mubr.f32.gmra.mrb[0].mxu0 %v1444
      %v1446 = vpop.f32.mrb[0].mxu0
      %v1447 = vadd.f32 %v1321, %v1446
      %v1448 = vpop.f32.mrb[0].mxu0
      %1449 = vmatprep.mubr.f32.mxu0 0.0
      %v1450 = vand.u32 %v1191, 4294901760
      %1451 = vmatmul.mubr.f32.gmra.mrb[0].mxu0 %v1450
      %v1452 = vpop.f32.mrb[0].mxu0
      %v1453 = vadd.f32 %v1331, %v1452
      %v1454 = vpop.f32.mrb[0].mxu0
      %1455 = vmatprep.mubr.f32.mxu0 0.0
      %v1456 = vand.u32 %v1194, 4294901760
      %1457 = vmatmul.mubr.f32.gmra.mrb[0].mxu0 %v1456
      %v1458 = vpop.f32.mrb[0].mxu0
      %v1459 = vadd.f32 %v1341, %v1458
      %v1460 = vpop.f32.mrb[0].mxu0
      %1461 = vdwg.mxu0
      %1462 = vmatprep.subr.mxu0 0.0
      %v1463 = vand.u32 %v1196, 4294901760
      %v1464 = vsub.f32 %v1196, %v1463
      %1465 = vmatpush1.msra.mxu0 %v1464
      %1466 = vmatprep.subr.mxu0 0.0
      %1467 = vmatpush1.msra.mxu0 0.0
      %1468 = vmatprep.subr.mxu0 0.0
      %1469 = vmatpush1.msra.mxu0 0.0
      %1470 = vmatprep.subr.mxu0 0.0
      %1471 = vmatpush1.msra.mxu0 0.0
      %1472 = vmatprep.subr.mxu0 0.0
      %1473 = vmatpush1.msra.mxu0 0.0
      %1474 = vmatprep.subr.mxu0 0.0
      %1475 = vmatpush1.msra.mxu0 0.0
      %1476 = vmatprep.subr.mxu0 0.0
      %1477 = vmatpush1.msra.mxu0 0.0
      %1478 = vmatprep.subr.mxu0 0.0
      %1479 = vmatpush1.msra.mxu0 0.0
      %1480 = vmatprep.subr.mxu0 0.0
      %1481 = vmatpush1.msra.mxu0 0.0
      %1482 = vmatprep.subr.mxu0 0.0
      %1483 = vmatpush1.msra.mxu0 0.0
      %1484 = vmatprep.subr.mxu0 0.0
      %1485 = vmatpush1.msra.mxu0 0.0
      %1486 = vmatprep.subr.mxu0 0.0
      %1487 = vmatpush1.msra.mxu0 0.0
      %1488 = vmatprep.subr.mxu0 0.0
      %1489 = vmatpush1.msra.mxu0 0.0
      %1490 = vmatprep.subr.mxu0 0.0
      %1491 = vmatpush1.msra.mxu0 0.0
      %1492 = vmatprep.subr.mxu0 0.0
      %1493 = vmatpush1.msra.mxu0 0.0
      %1494 = vmatprep.subr.mxu0 0.0
      %1495 = vmatpush1.msra.mxu0 0.0
      %1496 = vmatprep.subr.mxu0 0.0
      %1497 = vmatpush1.msra.mxu0 0.0
      %1498 = vmatprep.subr.mxu0 0.0
      %1499 = vmatpush1.msra.mxu0 0.0
      %1500 = vmatprep.subr.mxu0 0.0
      %1501 = vmatpush1.msra.mxu0 0.0
      %1502 = vmatprep.subr.mxu0 0.0
      %1503 = vmatpush1.msra.mxu0 0.0
      %1504 = vmatprep.subr.mxu0 0.0
      %1505 = vmatpush1.msra.mxu0 0.0
      %1506 = vmatprep.subr.mxu0 0.0
      %1507 = vmatpush1.msra.mxu0 0.0
      %1508 = vmatprep.subr.mxu0 0.0
      %1509 = vmatpush1.msra.mxu0 0.0
      %1510 = vmatprep.subr.mxu0 0.0
      %1511 = vmatpush1.msra.mxu0 0.0
      %1512 = vmatprep.subr.mxu0 0.0
      %1513 = vmatpush1.msra.mxu0 0.0
      %1514 = vmatprep.subr.mxu0 0.0
      %1515 = vmatpush1.msra.mxu0 0.0
      %1516 = vmatprep.subr.mxu0 0.0
      %1517 = vmatpush1.msra.mxu0 0.0
      %1518 = vmatprep.subr.mxu0 0.0
      %1519 = vmatpush1.msra.mxu0 0.0
      %1520 = vmatprep.subr.mxu0 0.0
      %1521 = vmatpush1.msra.mxu0 0.0
      %1522 = vmatprep.subr.mxu0 0.0
      %1523 = vmatpush1.msra.mxu0 0.0
      %1524 = vmatprep.subr.mxu0 0.0
      %1525 = vmatpush1.msra.mxu0 0.0
      %1526 = vmatprep.subr.mxu0 0.0
      %1527 = vmatpush1.msra.mxu0 0.0
      %1528 = vmatprep.mubr.f32.mxu0 0.0
      %v1529 = vand.u32 %v1173, 4294901760
      %v1530 = vsub.f32 %v1173, %v1529
      %1531 = vmatmul.mubr.f32.gmra.mrb[0].mxu0 %v1530
      %v1532 = vpop.f32.mrb[0].mxu0
      %v1533 = vadd.f32 %v1417, %v1532
      %v1534 = vpop.f32.mrb[0].mxu0
      %1535 = vmatprep.mubr.f32.mxu0 0.0
      %v1536 = vand.u32 %v1176, 4294901760
      %v1537 = vsub.f32 %v1176, %v1536
      %1538 = vmatmul.mubr.f32.gmra.mrb[0].mxu0 %v1537
      %v1539 = vpop.f32.mrb[0].mxu0
      %v1540 = vadd.f32 %v1423, %v1539
      %v1541 = vpop.f32.mrb[0].mxu0
      %1542 = vmatprep.mubr.f32.mxu0 0.0
      %v1543 = vand.u32 %v1179, 4294901760
      %v1544 = vsub.f32 %v1179, %v1543
      %1545 = vmatmul.mubr.f32.gmra.mrb[0].mxu0 %v1544
      %v1546 = vpop.f32.mrb[0].mxu0
      %v1547 = vadd.f32 %v1429, %v1546
      %v1548 = vpop.f32.mrb[0].mxu0
      %1549 = vmatprep.mubr.f32.mxu0 0.0
      %v1550 = vand.u32 %v1182, 4294901760
      %v1551 = vsub.f32 %v1182, %v1550
      %1552 = vmatmul.mubr.f32.gmra.mrb[0].mxu0 %v1551
      %v1553 = vpop.f32.mrb[0].mxu0
      %v1554 = vadd.f32 %v1435, %v1553
      %v1555 = vpop.f32.mrb[0].mxu0
      %1556 = vmatprep.mubr.f32.mxu0 0.0
      %v1557 = vand.u32 %v1185, 4294901760
      %v1558 = vsub.f32 %v1185, %v1557
      %1559 = vmatmul.mubr.f32.gmra.mrb[0].mxu0 %v1558
      %v1560 = vpop.f32.mrb[0].mxu0
      %v1561 = vadd.f32 %v1441, %v1560
      %v1562 = vpop.f32.mrb[0].mxu0
      %1563 = vmatprep.mubr.f32.mxu0 0.0
      %v1564 = vand.u32 %v1188, 4294901760
      %v1565 = vsub.f32 %v1188, %v1564
      %1566 = vmatmul.mubr.f32.gmra.mrb[0].mxu0 %v1565
      %v1567 = vpop.f32.mrb[0].mxu0
      %v1568 = vadd.f32 %v1447, %v1567
      %v1569 = vpop.f32.mrb[0].mxu0
      %1570 = vmatprep.mubr.f32.mxu0 0.0
      %v1571 = vand.u32 %v1191, 4294901760
      %v1572 = vsub.f32 %v1191, %v1571
      %1573 = vmatmul.mubr.f32.gmra.mrb[0].mxu0 %v1572
      %v1574 = vpop.f32.mrb[0].mxu0
      %v1575 = vadd.f32 %v1453, %v1574
      %v1576 = vpop.f32.mrb[0].mxu0
      %1577 = vmatprep.mubr.f32.mxu0 0.0
      %v1578 = vand.u32 %v1194, 4294901760
      %v1579 = vsub.f32 %v1194, %v1578
      %1580 = vmatmul.mubr.f32.gmra.mrb[0].mxu0 %v1579
      %v1581 = vpop.f32.mrb[0].mxu0
      %v1582 = vadd.f32 %v1459, %v1581
      %v1583 = vpop.f32.mrb[0].mxu0
      %1584 = vdwg.mxu0
      %1585 = vmatprep.subr.mxu0 0.0
      %v1586 = vand.u32 %v1196, 4294901760
      %1587 = vmatpush1.msra.mxu0 %v1586
      %1588 = vmatprep.subr.mxu0 0.0
      %1589 = vmatpush1.msra.mxu0 0.0
      %1590 = vmatprep.subr.mxu0 0.0
      %1591 = vmatpush1.msra.mxu0 0.0
      %1592 = vmatprep.subr.mxu0 0.0
      %1593 = vmatpush1.msra.mxu0 0.0
      %1594 = vmatprep.subr.mxu0 0.0
      %1595 = vmatpush1.msra.mxu0 0.0
      %1596 = vmatprep.subr.mxu0 0.0
      %1597 = vmatpush1.msra.mxu0 0.0
      %1598 = vmatprep.subr.mxu0 0.0
      %1599 = vmatpush1.msra.mxu0 0.0
      %1600 = vmatprep.subr.mxu0 0.0
      %1601 = vmatpush1.msra.mxu0 0.0
      %1602 = vmatprep.subr.mxu0 0.0
      %1603 = vmatpush1.msra.mxu0 0.0
      %1604 = vmatprep.subr.mxu0 0.0
      %1605 = vmatpush1.msra.mxu0 0.0
      %1606 = vmatprep.subr.mxu0 0.0
      %1607 = vmatpush1.msra.mxu0 0.0
      %1608 = vmatprep.subr.mxu0 0.0
      %1609 = vmatpush1.msra.mxu0 0.0
      %1610 = vmatprep.subr.mxu0 0.0
      %1611 = vmatpush1.msra.mxu0 0.0
      %1612 = vmatprep.subr.mxu0 0.0
      %1613 = vmatpush1.msra.mxu0 0.0
      %1614 = vmatprep.subr.mxu0 0.0
      %1615 = vmatpush1.msra.mxu0 0.0
      %1616 = vmatprep.subr.mxu0 0.0
      %1617 = vmatpush1.msra.mxu0 0.0
      %1618 = vmatprep.subr.mxu0 0.0
      %1619 = vmatpush1.msra.mxu0 0.0
      %1620 = vmatprep.subr.mxu0 0.0
      %1621 = vmatpush1.msra.mxu0 0.0
      %1622 = vmatprep.subr.mxu0 0.0
      %1623 = vmatpush1.msra.mxu0 0.0
      %1624 = vmatprep.subr.mxu0 0.0
      %1625 = vmatpush1.msra.mxu0 0.0
      %1626 = vmatprep.subr.mxu0 0.0
      %1627 = vmatpush1.msra.mxu0 0.0
      %1628 = vmatprep.subr.mxu0 0.0
      %1629 = vmatpush1.msra.mxu0 0.0
      %1630 = vmatprep.subr.mxu0 0.0
      %1631 = vmatpush1.msra.mxu0 0.0
      %1632 = vmatprep.subr.mxu0 0.0
      %1633 = vmatpush1.msra.mxu0 0.0
      %1634 = vmatprep.subr.mxu0 0.0
      %1635 = vmatpush1.msra.mxu0 0.0
      %1636 = vmatprep.subr.mxu0 0.0
      %1637 = vmatpush1.msra.mxu0 0.0
      %1638 = vmatprep.subr.mxu0 0.0
      %1639 = vmatpush1.msra.mxu0 0.0
      %1640 = vmatprep.subr.mxu0 0.0
      %1641 = vmatpush1.msra.mxu0 0.0
      %1642 = vmatprep.subr.mxu0 0.0
      %1643 = vmatpush1.msra.mxu0 0.0
      %1644 = vmatprep.subr.mxu0 0.0
      %1645 = vmatpush1.msra.mxu0 0.0
      %1646 = vmatprep.subr.mxu0 0.0
      %1647 = vmatpush1.msra.mxu0 0.0
      %1648 = vmatprep.subr.mxu0 0.0
      %1649 = vmatpush1.msra.mxu0 0.0
      %1650 = vmatprep.mubr.f32.mxu0 0.0
      %v1651 = vand.u32 %v1173, 4294901760
      %v1652 = vsub.f32 %v1173, %v1651
      %v1653 = vand.u32 %v1652, 4294901760
      %1654 = vmatmul.mubr.f32.gmra.mrb[0].mxu0 %v1653
      %v1655 = vpop.f32.mrb[0].mxu0
      %v1656 = vadd.f32 %v1533, %v1655
      %v1657 = vpop.f32.mrb[0].mxu0
      %1658 = vmatprep.mubr.f32.mxu0 0.0
      %v1659 = vand.u32 %v1176, 4294901760
      %v1660 = vsub.f32 %v1176, %v1659
      %v1661 = vand.u32 %v1660, 4294901760
      %1662 = vmatmul.mubr.f32.gmra.mrb[0].mxu0 %v1661
      %v1663 = vpop.f32.mrb[0].mxu0
      %v1664 = vadd.f32 %v1540, %v1663
      %v1665 = vpop.f32.mrb[0].mxu0
      %1666 = vmatprep.mubr.f32.mxu0 0.0
      %v1667 = vand.u32 %v1179, 4294901760
      %v1668 = vsub.f32 %v1179, %v1667
      %v1669 = vand.u32 %v1668, 4294901760
      %1670 = vmatmul.mubr.f32.gmra.mrb[0].mxu0 %v1669
      %v1671 = vpop.f32.mrb[0].mxu0
      %v1672 = vadd.f32 %v1547, %v1671
      %v1673 = vpop.f32.mrb[0].mxu0
      %1674 = vmatprep.mubr.f32.mxu0 0.0
      %v1675 = vand.u32 %v1182, 4294901760
      %v1676 = vsub.f32 %v1182, %v1675
      %v1677 = vand.u32 %v1676, 4294901760
      %1678 = vmatmul.mubr.f32.gmra.mrb[0].mxu0 %v1677
      %v1679 = vpop.f32.mrb[0].mxu0
      %v1680 = vadd.f32 %v1554, %v1679
      %v1681 = vpop.f32.mrb[0].mxu0
      %1682 = vmatprep.mubr.f32.mxu0 0.0
      %v1683 = vand.u32 %v1185, 4294901760
      %v1684 = vsub.f32 %v1185, %v1683
      %v1685 = vand.u32 %v1684, 4294901760
      %1686 = vmatmul.mubr.f32.gmra.mrb[0].mxu0 %v1685
      %v1687 = vpop.f32.mrb[0].mxu0
      %v1688 = vadd.f32 %v1561, %v1687
      %v1689 = vpop.f32.mrb[0].mxu0
      %1690 = vmatprep.mubr.f32.mxu0 0.0
      %v1691 = vand.u32 %v1188, 4294901760
      %v1692 = vsub.f32 %v1188, %v1691
      %v1693 = vand.u32 %v1692, 4294901760
      %1694 = vmatmul.mubr.f32.gmra.mrb[0].mxu0 %v1693
      %v1695 = vpop.f32.mrb[0].mxu0
      %v1696 = vadd.f32 %v1568, %v1695
      %v1697 = vpop.f32.mrb[0].mxu0
      %1698 = vmatprep.mubr.f32.mxu0 0.0
      %v1699 = vand.u32 %v1191, 4294901760
      %v1700 = vsub.f32 %v1191, %v1699
      %v1701 = vand.u32 %v1700, 4294901760
      %1702 = vmatmul.mubr.f32.gmra.mrb[0].mxu0 %v1701
      %v1703 = vpop.f32.mrb[0].mxu0
      %v1704 = vadd.f32 %v1575, %v1703
      %v1705 = vpop.f32.mrb[0].mxu0
      %1706 = vmatprep.mubr.f32.mxu0 0.0
      %v1707 = vand.u32 %v1194, 4294901760
      %v1708 = vsub.f32 %v1194, %v1707
      %v1709 = vand.u32 %v1708, 4294901760
      %1710 = vmatmul.mubr.f32.gmra.mrb[0].mxu0 %v1709
      %v1711 = vpop.f32.mrb[0].mxu0
      %v1712 = vadd.f32 %v1582, %v1711
      %v1713 = vpop.f32.mrb[0].mxu0
      %1714 = vdwg.mxu0
      %1715 = vmatprep.subr.mxu0 0.0
      %v1716 = vand.u32 %v1196, 4294901760
      %v1717 = vsub.f32 %v1196, %v1716
      %v1718 = vand.u32 %v1717, 4294901760
      %1719 = vmatpush1.msra.mxu0 %v1718
      %1720 = vmatprep.subr.mxu0 0.0
      %1721 = vmatpush1.msra.mxu0 0.0
      %1722 = vmatprep.subr.mxu0 0.0
      %1723 = vmatpush1.msra.mxu0 0.0
      %1724 = vmatprep.subr.mxu0 0.0
      %1725 = vmatpush1.msra.mxu0 0.0
      %1726 = vmatprep.subr.mxu0 0.0
      %1727 = vmatpush1.msra.mxu0 0.0
      %1728 = vmatprep.subr.mxu0 0.0
      %1729 = vmatpush1.msra.mxu0 0.0
      %1730 = vmatprep.subr.mxu0 0.0
      %1731 = vmatpush1.msra.mxu0 0.0
      %1732 = vmatprep.subr.mxu0 0.0
      %1733 = vmatpush1.msra.mxu0 0.0
      %1734 = vmatprep.subr.mxu0 0.0
      %1735 = vmatpush1.msra.mxu0 0.0
      %1736 = vmatprep.subr.mxu0 0.0
      %1737 = vmatpush1.msra.mxu0 0.0
      %1738 = vmatprep.subr.mxu0 0.0
      %1739 = vmatpush1.msra.mxu0 0.0
      %1740 = vmatprep.subr.mxu0 0.0
      %1741 = vmatpush1.msra.mxu0 0.0
      %1742 = vmatprep.subr.mxu0 0.0
      %1743 = vmatpush1.msra.mxu0 0.0
      %1744 = vmatprep.subr.mxu0 0.0
      %1745 = vmatpush1.msra.mxu0 0.0
      %1746 = vmatprep.subr.mxu0 0.0
      %1747 = vmatpush1.msra.mxu0 0.0
      %1748 = vmatprep.subr.mxu0 0.0
      %1749 = vmatpush1.msra.mxu0 0.0
      %1750 = vmatprep.subr.mxu0 0.0
      %1751 = vmatpush1.msra.mxu0 0.0
      %1752 = vmatprep.subr.mxu0 0.0
      %1753 = vmatpush1.msra.mxu0 0.0
      %1754 = vmatprep.subr.mxu0 0.0
      %1755 = vmatpush1.msra.mxu0 0.0
      %1756 = vmatprep.subr.mxu0 0.0
      %1757 = vmatpush1.msra.mxu0 0.0
      %1758 = vmatprep.subr.mxu0 0.0
      %1759 = vmatpush1.msra.mxu0 0.0
      %1760 = vmatprep.subr.mxu0 0.0
      %1761 = vmatpush1.msra.mxu0 0.0
      %1762 = vmatprep.subr.mxu0 0.0
      %1763 = vmatpush1.msra.mxu0 0.0
      %1764 = vmatprep.subr.mxu0 0.0
      %1765 = vmatpush1.msra.mxu0 0.0
      %1766 = vmatprep.subr.mxu0 0.0
      %1767 = vmatpush1.msra.mxu0 0.0
      %1768 = vmatprep.subr.mxu0 0.0
      %1769 = vmatpush1.msra.mxu0 0.0
      %1770 = vmatprep.subr.mxu0 0.0
      %1771 = vmatpush1.msra.mxu0 0.0
      %1772 = vmatprep.subr.mxu0 0.0
      %1773 = vmatpush1.msra.mxu0 0.0
      %1774 = vmatprep.subr.mxu0 0.0
      %1775 = vmatpush1.msra.mxu0 0.0
      %1776 = vmatprep.subr.mxu0 0.0
      %1777 = vmatpush1.msra.mxu0 0.0
      %1778 = vmatprep.subr.mxu0 0.0
      %1779 = vmatpush1.msra.mxu0 0.0
      %1780 = vmatprep.subr.mxu0 0.0
      %1781 = vmatpush1.msra.mxu0 0.0
      %1782 = vmatprep.mubr.f32.mxu0 0.0
      %v1783 = vand.u32 %v1173, 4294901760
      %1784 = vmatmul.mubr.f32.gmra.mrb[0].mxu0 %v1783
      %v1785 = vpop.f32.mrb[0].mxu0
      %v1786 = vadd.f32 %v1656, %v1785
      %v1787 = vpop.f32.mrb[0].mxu0
      %1788 = vmatprep.mubr.f32.mxu0 0.0
      %v1789 = vand.u32 %v1176, 4294901760
      %1790 = vmatmul.mubr.f32.gmra.mrb[0].mxu0 %v1789
      %v1791 = vpop.f32.mrb[0].mxu0
      %v1792 = vadd.f32 %v1664, %v1791
      %v1793 = vpop.f32.mrb[0].mxu0
      %1794 = vmatprep.mubr.f32.mxu0 0.0
      %v1795 = vand.u32 %v1179, 4294901760
      %1796 = vmatmul.mubr.f32.gmra.mrb[0].mxu0 %v1795
      %v1797 = vpop.f32.mrb[0].mxu0
      %v1798 = vadd.f32 %v1672, %v1797
      %v1799 = vpop.f32.mrb[0].mxu0
      %1800 = vmatprep.mubr.f32.mxu0 0.0
      %v1801 = vand.u32 %v1182, 4294901760
      %1802 = vmatmul.mubr.f32.gmra.mrb[0].mxu0 %v1801
      %v1803 = vpop.f32.mrb[0].mxu0
      %v1804 = vadd.f32 %v1680, %v1803
      %v1805 = vpop.f32.mrb[0].mxu0
      %1806 = vmatprep.mubr.f32.mxu0 0.0
      %v1807 = vand.u32 %v1185, 4294901760
      %1808 = vmatmul.mubr.f32.gmra.mrb[0].mxu0 %v1807
      %v1809 = vpop.f32.mrb[0].mxu0
      %v1810 = vadd.f32 %v1688, %v1809
      %v1811 = vpop.f32.mrb[0].mxu0
      %1812 = vmatprep.mubr.f32.mxu0 0.0
      %v1813 = vand.u32 %v1188, 4294901760
      %1814 = vmatmul.mubr.f32.gmra.mrb[0].mxu0 %v1813
      %v1815 = vpop.f32.mrb[0].mxu0
      %v1816 = vadd.f32 %v1696, %v1815
      %v1817 = vpop.f32.mrb[0].mxu0
      %1818 = vmatprep.mubr.f32.mxu0 0.0
      %v1819 = vand.u32 %v1191, 4294901760
      %1820 = vmatmul.mubr.f32.gmra.mrb[0].mxu0 %v1819
      %v1821 = vpop.f32.mrb[0].mxu0
      %v1822 = vadd.f32 %v1704, %v1821
      %v1823 = vpop.f32.mrb[0].mxu0
      %1824 = vmatprep.mubr.f32.mxu0 0.0
      %v1825 = vand.u32 %v1194, 4294901760
      %1826 = vmatmul.mubr.f32.gmra.mrb[0].mxu0 %v1825
      %v1827 = vpop.f32.mrb[0].mxu0
      %v1828 = vadd.f32 %v1712, %v1827
      %v1829 = vpop.f32.mrb[0].mxu0
      %1830 = vdwg.mxu0
      %1831 = vmatprep.subr.mxu0 0.0
      %v1832 = vand.u32 %v1196, 4294901760
      %1833 = vmatpush1.msra.mxu0 %v1832
      %1834 = vmatprep.subr.mxu0 0.0
      %1835 = vmatpush1.msra.mxu0 0.0
      %1836 = vmatprep.subr.mxu0 0.0
      %1837 = vmatpush1.msra.mxu0 0.0
      %1838 = vmatprep.subr.mxu0 0.0
      %1839 = vmatpush1.msra.mxu0 0.0
      %1840 = vmatprep.subr.mxu0 0.0
      %1841 = vmatpush1.msra.mxu0 0.0
      %1842 = vmatprep.subr.mxu0 0.0
      %1843 = vmatpush1.msra.mxu0 0.0
      %1844 = vmatprep.subr.mxu0 0.0
      %1845 = vmatpush1.msra.mxu0 0.0
      %1846 = vmatprep.subr.mxu0 0.0
      %1847 = vmatpush1.msra.mxu0 0.0
      %1848 = vmatprep.subr.mxu0 0.0
      %1849 = vmatpush1.msra.mxu0 0.0
      %1850 = vmatprep.subr.mxu0 0.0
      %1851 = vmatpush1.msra.mxu0 0.0
      %1852 = vmatprep.subr.mxu0 0.0
      %1853 = vmatpush1.msra.mxu0 0.0
      %1854 = vmatprep.subr.mxu0 0.0
      %1855 = vmatpush1.msra.mxu0 0.0
      %1856 = vmatprep.subr.mxu0 0.0
      %1857 = vmatpush1.msra.mxu0 0.0
      %1858 = vmatprep.subr.mxu0 0.0
      %1859 = vmatpush1.msra.mxu0 0.0
      %1860 = vmatprep.subr.mxu0 0.0
      %1861 = vmatpush1.msra.mxu0 0.0
      %1862 = vmatprep.subr.mxu0 0.0
      %1863 = vmatpush1.msra.mxu0 0.0
      %1864 = vmatprep.subr.mxu0 0.0
      %1865 = vmatpush1.msra.mxu0 0.0
      %1866 = vmatprep.subr.mxu0 0.0
      %1867 = vmatpush1.msra.mxu0 0.0
      %1868 = vmatprep.subr.mxu0 0.0
      %1869 = vmatpush1.msra.mxu0 0.0
      %1870 = vmatprep.subr.mxu0 0.0
      %1871 = vmatpush1.msra.mxu0 0.0
      %1872 = vmatprep.subr.mxu0 0.0
      %1873 = vmatpush1.msra.mxu0 0.0
      %1874 = vmatprep.subr.mxu0 0.0
      %1875 = vmatpush1.msra.mxu0 0.0
      %1876 = vmatprep.subr.mxu0 0.0
      %1877 = vmatpush1.msra.mxu0 0.0
      %1878 = vmatprep.subr.mxu0 0.0
      %1879 = vmatpush1.msra.mxu0 0.0
      %1880 = vmatprep.subr.mxu0 0.0
      %1881 = vmatpush1.msra.mxu0 0.0
      %1882 = vmatprep.subr.mxu0 0.0
      %1883 = vmatpush1.msra.mxu0 0.0
      %1884 = vmatprep.subr.mxu0 0.0
      %1885 = vmatpush1.msra.mxu0 0.0
      %1886 = vmatprep.subr.mxu0 0.0
      %1887 = vmatpush1.msra.mxu0 0.0
      %1888 = vmatprep.subr.mxu0 0.0
      %1889 = vmatpush1.msra.mxu0 0.0
      %1890 = vmatprep.subr.mxu0 0.0
      %1891 = vmatpush1.msra.mxu0 0.0
      %1892 = vmatprep.subr.mxu0 0.0
      %1893 = vmatpush1.msra.mxu0 0.0
      %1894 = vmatprep.subr.mxu0 0.0
      %1895 = vmatpush1.msra.mxu0 0.0
      %1896 = vmatprep.mubr.f32.mxu0 0.0
      %v1897 = vand.u32 %v1173, 4294901760
      %1898 = vmatmul.mubr.f32.gmra.mrb[0].mxu0 %v1897
      %v1899 = vpop.f32.mrb[0].mxu0
      %v1900 = vadd.f32 %v1786, %v1899
      %v1901 = vpop.f32.mrb[0].mxu0
      %1902 = vmatprep.mubr.f32.mxu0 0.0
      %v1903 = vand.u32 %v1176, 4294901760
      %1904 = vmatmul.mubr.f32.gmra.mrb[0].mxu0 %v1903
      %v1905 = vpop.f32.mrb[0].mxu0
      %v1906 = vadd.f32 %v1792, %v1905
      %v1907 = vpop.f32.mrb[0].mxu0
      %1908 = vmatprep.mubr.f32.mxu0 0.0
      %v1909 = vand.u32 %v1179, 4294901760
      %1910 = vmatmul.mubr.f32.gmra.mrb[0].mxu0 %v1909
      %v1911 = vpop.f32.mrb[0].mxu0
      %v1912 = vadd.f32 %v1798, %v1911
      %v1913 = vpop.f32.mrb[0].mxu0
      %1914 = vmatprep.mubr.f32.mxu0 0.0
      %v1915 = vand.u32 %v1182, 4294901760
      %1916 = vmatmul.mubr.f32.gmra.mrb[0].mxu0 %v1915
      %v1917 = vpop.f32.mrb[0].mxu0
      %v1918 = vadd.f32 %v1804, %v1917
      %v1919 = vpop.f32.mrb[0].mxu0
      %1920 = vmatprep.mubr.f32.mxu0 0.0
      %v1921 = vand.u32 %v1185, 4294901760
      %1922 = vmatmul.mubr.f32.gmra.mrb[0].mxu0 %v1921
      %v1923 = vpop.f32.mrb[0].mxu0
      %v1924 = vadd.f32 %v1810, %v1923
      %v1925 = vpop.f32.mrb[0].mxu0
      %1926 = vmatprep.mubr.f32.mxu0 0.0
      %v1927 = vand.u32 %v1188, 4294901760
      %1928 = vmatmul.mubr.f32.gmra.mrb[0].mxu0 %v1927
      %v1929 = vpop.f32.mrb[0].mxu0
      %v1930 = vadd.f32 %v1816, %v1929
      %v1931 = vpop.f32.mrb[0].mxu0
      %1932 = vmatprep.mubr.f32.mxu0 0.0
      %v1933 = vand.u32 %v1191, 4294901760
      %1934 = vmatmul.mubr.f32.gmra.mrb[0].mxu0 %v1933
      %v1935 = vpop.f32.mrb[0].mxu0
      %v1936 = vadd.f32 %v1822, %v1935
      %v1937 = vpop.f32.mrb[0].mxu0
      %1938 = vmatprep.mubr.f32.mxu0 0.0
      %v1939 = vand.u32 %v1194, 4294901760
      %1940 = vmatmul.mubr.f32.gmra.mrb[0].mxu0 %v1939
      %v1941 = vpop.f32.mrb[0].mxu0
      %v1942 = vadd.f32 %v1828, %v1941
      %v1943 = vpop.f32.mrb[0].mxu0
      %1944 = vdwg.mxu0
      %s1945 = sld [smem:[#allocation2]]
      %v1946 = vstv %s1945
      %v1947 = vadd.f32 %v1900, %v1946
      %v1948 = vadd.f32 %v1906, %v1946
      %v1949 = vadd.f32 %v1912, %v1946
      %v1950 = vadd.f32 %v1918, %v1946
      %v1951 = vadd.f32 %v1924, %v1946
      %v1952 = vadd.f32 %v1930, %v1946
      %v1953 = vadd.f32 %v1936, %v1946
      %v1954 = vadd.f32 %v1942, %v1946
      %v1955 = vxor.u32 %v1947, 2147483648
      %v1956 = vxor.u32 %v1948, 2147483648
      %v1957 = vxor.u32 %v1949, 2147483648
      %v1958 = vxor.u32 %v1950, 2147483648
      %v1959 = vxor.u32 %v1951, 2147483648
      %v1960 = vxor.u32 %v1952, 2147483648
      %v1961 = vxor.u32 %v1953, 2147483648
      %v1962 = vxor.u32 %v1954, 2147483648
      %v1963 = vmul.f32 %v1955, 1.442695
      %v1964 = vpow.pop %v1963
      %v1965 = vmul.f32 %v1956, 1.442695
      %v1966 = vpow.pop %v1965
      %v1967 = vmul.f32 %v1957, 1.442695
      %v1968 = vpow.pop %v1967
      %v1969 = vmul.f32 %v1958, 1.442695
      %v1970 = vpow.pop %v1969
      %v1971 = vmul.f32 %v1959, 1.442695
      %v1972 = vpow.pop %v1971
      %v1973 = vmul.f32 %v1960, 1.442695
      %v1974 = vpow.pop %v1973
      %v1975 = vmul.f32 %v1961, 1.442695
      %v1976 = vpow.pop %v1975
      %v1977 = vmul.f32 %v1962, 1.442695
      %v1978 = vpow.pop %v1977
      %v1979 = vadd.f32 %v1964, 1.0
      %v1980 = vadd.f32 %v1966, 1.0
      %v1981 = vadd.f32 %v1968, 1.0
      %v1982 = vadd.f32 %v1970, 1.0
      %v1983 = vadd.f32 %v1972, 1.0
      %v1984 = vadd.f32 %v1974, 1.0
      %v1985 = vadd.f32 %v1976, 1.0
      %v1986 = vadd.f32 %v1978, 1.0
      %v1987 = vrcp.pop %v1979
      %v1988 = vmul.f32 1.0, %v1987
      %v1989 = vrcp.pop %v1980
      %v1990 = vmul.f32 1.0, %v1989
      %v1991 = vrcp.pop %v1981
      %v1992 = vmul.f32 1.0, %v1991
      %v1993 = vrcp.pop %v1982
      %v1994 = vmul.f32 1.0, %v1993
      %v1995 = vrcp.pop %v1983
      %v1996 = vmul.f32 1.0, %v1995
      %v1997 = vrcp.pop %v1984
      %v1998 = vmul.f32 1.0, %v1997
      %v1999 = vrcp.pop %v1985
      %v2000 = vmul.f32 1.0, %v1999
      %v2001 = vrcp.pop %v1986
      %v2002 = vmul.f32 1.0, %v2001
      %2004 = vset.pattern.permute.xlu0 0
      %2005 = vperm.xlu0 %2004, %v1988
      %v2006 = vpop.permute.xlu0 %2005
      %2009 = vset.pattern.permute.xlu0 0
      %2010 = vperm.xlu0 %2009, %v1990
      %v2011 = vpop.permute.xlu0 %2010
      %2014 = vset.pattern.permute.xlu0 0
      %2015 = vperm.xlu0 %2014, %v1992
      %v2016 = vpop.permute.xlu0 %2015
      %2019 = vset.pattern.permute.xlu0 0
      %2020 = vperm.xlu0 %2019, %v1994
      %v2021 = vpop.permute.xlu0 %2020
      %2024 = vset.pattern.permute.xlu0 0
      %2025 = vperm.xlu0 %2024, %v1996
      %v2026 = vpop.permute.xlu0 %2025
      %2029 = vset.pattern.permute.xlu0 0
      %2030 = vperm.xlu0 %2029, %v1998
      %v2031 = vpop.permute.xlu0 %2030
      %2034 = vset.pattern.permute.xlu0 0
      %2035 = vperm.xlu0 %2034, %v2000
      %v2036 = vpop.permute.xlu0 %2035
      %2039 = vset.pattern.permute.xlu0 0
      %2040 = vperm.xlu0 %2039, %v2002
      %v2041 = vpop.permute.xlu0 %2040
      %v2043 = vmul.f32 %v385, %v2006
      %v2044 = vmul.f32 %v386, %v2011
      %v2045 = vmul.f32 %v387, %v2016
      %v2046 = vmul.f32 %v388, %v2021
      %v2047 = vmul.f32 %v389, %v2026
      %v2048 = vmul.f32 %v390, %v2031
      %v2049 = vmul.f32 %v391, %v2036
      %v2050 = vmul.f32 %v392, %v2041
      %v2051 = vadd.f32 %v2043, %v335
      %v2052 = vadd.f32 %v2044, %v336
      %v2053 = vadd.f32 %v2045, %v337
      %v2054 = vadd.f32 %v2046, %v338
      %v2055 = vadd.f32 %v2047, %v339
      %v2056 = vadd.f32 %v2048, %v340
      %v2057 = vadd.f32 %v2049, %v341
      %v2058 = vadd.f32 %v2050, %v342
      %v2059 = vmul.f32 %v365, %v2006
      %v2060 = vmul.f32 %v366, %v2011
      %v2061 = vmul.f32 %v367, %v2016
      %v2062 = vmul.f32 %v368, %v2021
      %v2063 = vmul.f32 %v369, %v2026
      %v2064 = vmul.f32 %v370, %v2031
      %v2065 = vmul.f32 %v371, %v2036
      %v2066 = vmul.f32 %v372, %v2041
      %v2067 = vadd.f32 %v2059, %v343
      %v2068 = vadd.f32 %v2060, %v344
      %v2069 = vadd.f32 %v2061, %v345
      %v2070 = vadd.f32 %v2062, %v346
      %v2071 = vadd.f32 %v2063, %v347
      %v2072 = vadd.f32 %v2064, %v348
      %v2073 = vadd.f32 %v2065, %v349
      %v2074 = vadd.f32 %v2066, %v350
      %2083 = vrot.lane.b32.xlu0 %v2067, 4
      %v2084 = vpop.permute.xlu0 %2083
      %2085 = vrot.lane.b32.xlu0 %v2068, 4
      %v2086 = vpop.permute.xlu0 %2085
      %2087 = vrot.lane.b32.xlu0 %v2069, 4
      %v2088 = vpop.permute.xlu0 %2087
      %2089 = vrot.lane.b32.xlu0 %v2070, 4
      %v2090 = vpop.permute.xlu0 %2089
      %2091 = vrot.lane.b32.xlu0 %v2071, 4
      %v2092 = vpop.permute.xlu0 %2091
      %2093 = vrot.lane.b32.xlu0 %v2072, 4
      %v2094 = vpop.permute.xlu0 %2093
      %2095 = vrot.lane.b32.xlu0 %v2073, 4
      %v2096 = vpop.permute.xlu0 %2095
      %2097 = vrot.lane.b32.xlu0 %v2074, 4
      %v2098 = vpop.permute.xlu0 %2097
      %v2107 = vsel %vm397, %v2051, %v2084
      %v2108 = vsel %vm397, %v2052, %v2086
      %v2109 = vsel %vm397, %v2053, %v2088
      %v2110 = vsel %vm397, %v2054, %v2090
      %v2111 = vsel %vm397, %v2055, %v2092
      %v2112 = vsel %vm397, %v2056, %v2094
      %v2113 = vsel %vm397, %v2057, %v2096
      %v2114 = vsel %vm397, %v2058, %v2098
      %vm2115 = vcmask 64512
      %2116 = vst.msk [vmem:[%s333] sm:$0xff] %vm2115, %v2107
      %2117 = vst.msk [vmem:[%s333 + $0x8] sm:$0xff] %vm2115, %v2108
      %2118 = vst.msk [vmem:[%s333 + $0x10] sm:$0xff] %vm2115, %v2109
      %2119 = vst.msk [vmem:[%s333 + $0x18] sm:$0xff] %vm2115, %v2110
      %2120 = vst.msk [vmem:[%s333 + $0x20] sm:$0xff] %vm2115, %v2111
      %2121 = vst.msk [vmem:[%s333 + $0x28] sm:$0xff] %vm2115, %v2112
      %2122 = vst.msk [vmem:[%s333 + $0x30] sm:$0xff] %vm2115, %v2113
      %2123 = vst.msk [vmem:[%s333 + $0x38] sm:$0xff] %vm2115, %v2114
      %s2124 = smul.u32 8, %s22
      %p2125 = scmp.lt.s32.totalorder %s21, 1
      %s2126 = scalar_select %p2125, %s21, 1
      %p2127 = scmp.lt.s32.totalorder %s2124, 7
      %s2128 = scalar_select %p2127, %s2124, 7
      %s2129 = smul.addr %s2126, 8
      %s2130 = sadd.s32 %s2128, %s2129
      %s2131 = smul.addr %s2130, 8
      %s2132 = scalar_lea.vmem %s5, %s2131
      // Predicated region
      $region41: #{tpu_custom_call.1} parent=39 // pred_check
        %p2133 = pneg %p178
      $region42: #{tpu_custom_call.1} parent=39 // pred_check_branch
        %2135 = sbr.rel (%p2133) target = $region44
      $region43: #{tpu_custom_call.1} parent=39 // pred_region
        %s2136 = smul.u32 8, %s22
      $region44: #{tpu_custom_call.1} parent=39 // pred_fallthru
        _
    $region40: #{tpu_custom_call.1} parent=5 // pred_fallthru
      _
    %p2137 = scmp.le.s32.totalorder 2, %s12
    // Predicated region
    $region45: #{tpu_custom_call.1} parent=5 // pred_check
      %p2138 = pneg %p2137
    $region46: #{tpu_custom_call.1} parent=5 // pred_check_branch
      %2140 = sbr.rel (%p2138) target = $region48
    $region47: #{tpu_custom_call.1} parent=5 // pred_region
      %s2141 = ssub.s32 %s12, 2
      // Predicated region
      $region49: #{tpu_custom_call.1} parent=47 // pred_check
        %p2142 = pneg %p184
      $region50: #{tpu_custom_call.1} parent=47 // pred_check_branch
        %2144 = sbr.rel (%p2142) target = $region52
      $region51: #{tpu_custom_call.1} parent=47 // pred_region
        %s2145 = smul.u32 8, %s24
        %p2146 = scmp.lt.s32.totalorder %s23, 1
        %s2147 = scalar_select %p2146, %s23, 1
        %p2148 = scmp.lt.s32.totalorder %s2145, 7
        %s2149 = scalar_select %p2148, %s2145, 7
        %s2150 = smul.addr %s2147, 8
        %s2151 = sadd.s32 %s2149, %s2150
        %s2152 = smul.addr %s2151, 8
        %s2153 = scalar_lea.vmem %s5, %s2152
      $region52: #{tpu_custom_call.1} parent=47 // pred_fallthru
        _
    $region48: #{tpu_custom_call.1} parent=5 // pred_fallthru
      _
  $region6: #{tpu_custom_call.1} parent=0 // loop_footer
    %s16 = sadd.s32 1, %s12
  $region7: #{tpu_custom_call.1} parent=0 // loop_footer_branch
    %11 = sbr.rel target = $region3
  $region8: #{tpu_custom_call.1} parent=0 // loop_exit
    _

</llo_original>
